<compile_context>
chip_gen: v5e
topology: v5e:2x2
jax: 0.10.0
libtpu: 0.0.40
codegen_flags: <defaults>
</compile_context>

<pallas_src>
import jax
import jax.numpy as jnp
import numpy as np
from jax.experimental import pallas as pl
from jax.experimental.pallas import tpu as pltpu


def market_predictor_kernel(x_ref,      # (T*Bp, I)  time-major, row = t*Bp + b
                            wih0_ref,   # (I, 4H)    layer-0 input W, gates (i,f,o,g)
                            b0_ref,     # (1, 4H)    b_ih + b_hh, layer 0
                            wf_ref,     # (2H, 8H)   [[Whh0, Wih1], [0, Whh1]]
                            b1_ref,     # (1, 4H)    b_ih + b_hh, layer 1
                            fc1w_ref,   # (H, 64)
                            fc1b_ref,   # (1, 64)
                            fc2w_ref,   # (1, 64)    row vector
                            fc2b_ref,   # (1, 1)
                            out_ref):   # (Bp, 1)
    Bp = out_ref.shape[0]
    H = wf_ref.shape[0] // 2
    G = 4 * H                              # packed gate width (one vreg when 4H=128)
    T = x_ref.shape[0] // Bp

    # Hoisted layer-0 input projection + bias fold: one (T*Bp,I)x(I,4H) MXU
    # pass, off the serial recurrent path.
    xp = (jnp.dot(x_ref[...], wih0_ref[...], preferred_element_type=jnp.float32)
          + b0_ref[...])                                      # (T*Bp, 4H)

    wf = wf_ref[...]                                          # (2H, 8H)
    b1 = jnp.broadcast_to(b1_ref[...], (Bp, G))               # broadcast once

    def gates_to_hc(gates, c):
        # gates: (Bp, 4H) packed (i, f, o, g) == exactly one (8,128) vreg.
        # Full-128-lane EUP passes (same cost as partial-lane passes); the
        # quadrant extracts are static whole-sublane lane slices that lower to
        # XLU lane rotations rather than masked VALU selects.
        s = jax.nn.sigmoid(gates)
        th = jnp.tanh(gates)
        i = s[:, 0:H]
        f = s[:, H:2 * H]
        o = s[:, 2 * H:3 * H]
        g = th[:, 3 * H:4 * H]
        c_new = f * c + i * g
        h_new = o * jnp.tanh(c_new)
        return h_new, c_new

    zeros = jnp.zeros((Bp, H), jnp.float32)

    # t = 0, layer 0: zero initial state => gates are xp[0:Bp] directly
    # (skips one dependent recurrent matmul on the critical path).
    h0, c0 = gates_to_hc(xp[0:Bp, :], zeros)
    h1, c1 = zeros, zeros

    # Fully unrolled recurrence; carries live in vregs.  Each step issues ONE
    # fused (Bp,2H)x(2H,8H) matmul: cols [:4H] = h0(t)@Whh0 (layer-0 recurrence
    # for t+1), cols [4H:] = h0(t)@Wih1 + h1(t-1)@Whh1 (layer-1 gates at t).
    # Critical chain per step ~= 1 matmul + 1 EUP.
    for t in range(T):
        fused = jnp.dot(jnp.concatenate([h0, h1], axis=-1), wf,
                        preferred_element_type=jnp.float32)   # (Bp, 8H)
        # Layer 1 at time t (its EUP runs in parallel with the layer-0 update).
        h1, c1 = gates_to_hc(fused[:, G:] + b1, c1)
        # TODO(synk): inter-layer dropout(p=0.2) omitted (eval/inference semantics).
        # Layer 0 at time t+1 (not needed after the last step).
        if t + 1 < T:
            h0, c0 = gates_to_hc(xp[(t + 1) * Bp:(t + 2) * Bp, :] + fused[:, :G],
                                 c0)

    # FC head on the last-timestep hidden state of the top LSTM layer.
    y = (jnp.dot(h1, fc1w_ref[...], preferred_element_type=jnp.float32)
         + fc1b_ref[...])
    y = jnp.maximum(y, 0.0)
    # TODO(synk): head dropout(p=0.2) omitted (eval/inference semantics).
    # An N=1 MXU matmul would waste a full pass; VPU multiply + lane reduce.
    out_ref[...] = (jnp.sum(y * fc2w_ref[...], axis=-1, keepdims=True)
                    + fc2b_ref[...])


def market_predictor(x, kp):
    """x: (B, T, I) batch_first, like the PyTorch module. Returns (B, 1)."""
    B, T, I = x.shape
    # Pad batch to the 8-sublane granularity so every per-step slice / carry
    # inside the kernel is a whole vreg; padded rows are dead work discarded at
    # the end (the MXU pass costs the same for M=2 and M=8).
    Bp = max(8, ((B + 7) // 8) * 8)
    xt = jnp.transpose(x, (1, 0, 2)).astype(jnp.float32)      # (T, B, I)
    if Bp != B:
        xt = jnp.pad(xt, ((0, 0), (0, Bp - B), (0, 0)))
    x2d = xt.reshape(T * Bp, I)                               # time-major rows

    # NOTE(scaling): the hoisted xp buffer inside the kernel is (T*Bp, 4H) f32
    # and fully VMEM-resident — fine here (<100 KiB), but tile it over T/B with
    # a grid (and shard a batch grid across v7x's 2 TCs) before reusing this
    # kernel at production batch/hidden sizes.
    vmem = pl.BlockSpec(memory_space=pltpu.MemorySpace.VMEM)
    args = (x2d, kp["wih0"], kp["b0"], kp["wf"], kp["b1"],
            kp["fc1w"], kp["fc1b"], kp["fc2w"], kp["fc2b"])
    out = pl.pallas_call(
        market_predictor_kernel,
        out_shape=jax.ShapeDtypeStruct((Bp, 1), jnp.float32),
        in_specs=[vmem] * len(args),
        out_specs=vmem,
    )(*args)
    return out[:B]


def init_raw_params(key, input_size, hidden_size):
    """Deterministic synthetic parameters in native PyTorch shapes/order."""
    H = hidden_size
    ks = jax.random.split(key, 12)
    s = 0.1

    def rnd(k, shape):
        return (s * jax.random.normal(k, shape)).astype(jnp.float32)

    return {
        "w_ih_l0": rnd(ks[0], (4 * H, input_size)),
        "w_hh_l0": rnd(ks[1], (4 * H, H)),
        "b_ih_l0": rnd(ks[2], (4 * H,)),
        "b_hh_l0": rnd(ks[3], (4 * H,)),
        "w_ih_l1": rnd(ks[4], (4 * H, H)),
        "w_hh_l1": rnd(ks[5], (4 * H, H)),
        "b_ih_l1": rnd(ks[6], (4 * H,)),
        "b_hh_l1": rnd(ks[7], (4 * H,)),
        "fc1_w": rnd(ks[8], (64, H)),
        "fc1_b": rnd(ks[9], (64,)),
        "fc2_w": rnd(ks[10], (1, 64)),
        "fc2_b": rnd(ks[11], (1,)),
    }


def prepare_kernel_params(raw):
    """Repack PyTorch-layout LSTM/Linear weights for the kernel:
       gate order (i,f,g,o)->(i,f,o,g), (in,out) transposes, combined biases,
       fused block-diagonal recurrent weight [[Whh0, Wih1],[0, Whh1]],
       fc2 as a row vector."""
    def reorder(a, axis=0):
        i_, f_, g_, o_ = jnp.split(a, 4, axis=axis)
        return jnp.concatenate([i_, f_, o_, g_], axis=axis)

    H = raw["w_hh_l0"].shape[1]
    whh0 = reorder(raw["w_hh_l0"]).T                          # (H, 4H)
    wih1 = reorder(raw["w_ih_l1"]).T                          # (H, 4H)
    whh1 = reorder(raw["w_hh_l1"]).T                          # (H, 4H)
    wf = jnp.concatenate(
        [jnp.concatenate([whh0, wih1], axis=1),
         jnp.concatenate([jnp.zeros((H, 4 * H), jnp.float32), whh1], axis=1)],
        axis=0)                                               # (2H, 8H)

    return {
        "wih0": reorder(raw["w_ih_l0"]).T,                    # (I, 4H)
        "b0": reorder(raw["b_ih_l0"] + raw["b_hh_l0"])[None, :],
        "wf": wf,
        "b1": reorder(raw["b_ih_l1"] + raw["b_hh_l1"])[None, :],
        "fc1w": raw["fc1_w"].T,                               # (H, 64)
        "fc1b": raw["fc1_b"][None, :],                        # (1, 64)
        "fc2w": raw["fc2_w"],                                 # (1, 64)
        "fc2b": raw["fc2_b"][None, :],                        # (1, 1)
    }


def reference_forward(x, raw):
    """Pure-JAX reference mirroring the PyTorch module (eval mode)."""
    B, T, I = x.shape
    H = raw["w_hh_l0"].shape[1]

    def cell(x_t, h, c, w_ih, w_hh, b_ih, b_hh):
        gates = x_t @ w_ih.T + h @ w_hh.T + b_ih + b_hh
        i = jax.nn.sigmoid(gates[:, 0:H])
        f = jax.nn.sigmoid(gates[:, H:2 * H])
        g = jnp.tanh(gates[:, 2 * H:3 * H])
        o = jax.nn.sigmoid(gates[:, 3 * H:4 * H])
        c_new = f * c + i * g
        return o * jnp.tanh(c_new), c_new

    h0 = c0 = h1 = c1 = jnp.zeros((B, H), jnp.float32)
    for t in range(T):
        h0, c0 = cell(x[:, t, :], h0, c0,
                      raw["w_ih_l0"], raw["w_hh_l0"], raw["b_ih_l0"], raw["b_hh_l0"])
        h1, c1 = cell(h0, h1, c1,
                      raw["w_ih_l1"], raw["w_hh_l1"], raw["b_ih_l1"], raw["b_hh_l1"])
    y = jnp.maximum(h1 @ raw["fc1_w"].T + raw["fc1_b"], 0.0)
    return y @ raw["fc2_w"].T + raw["fc2_b"]


if __name__ == "__main__":
    B, T, I, H = 2, 8, 16, 32   # 4H = 128 -> packed gates are exactly one vreg

    key = jax.random.PRNGKey(0)
    k_x, k_p = jax.random.split(key)
    x = jax.random.normal(k_x, (B, T, I), dtype=jnp.float32)

    raw = init_raw_params(k_p, input_size=I, hidden_size=H)
    kparams = prepare_kernel_params(raw)

    out = market_predictor(x, kparams)
    out = jax.block_until_ready(out)

    ref = jax.block_until_ready(reference_forward(x, raw))
    assert out.shape == (B, 1)
    np.testing.assert_allclose(np.asarray(out), np.asarray(ref), rtol=2e-4, atol=2e-5)

    print("KERNEL_OK")
</pallas_src>

<mosaic_0001>
module attributes {stable_mosaic.version = 11 : i64} {
  func.func @market_predictor_kernel(%arg0: memref<64x16xf32, #tpu.memory_space<vmem>>, %arg1: memref<16x128xf32, #tpu.memory_space<vmem>>, %arg2: memref<1x128xf32, #tpu.memory_space<vmem>>, %arg3: memref<64x256xf32, #tpu.memory_space<vmem>>, %arg4: memref<1x128xf32, #tpu.memory_space<vmem>>, %arg5: memref<32x64xf32, #tpu.memory_space<vmem>>, %arg6: memref<1x64xf32, #tpu.memory_space<vmem>>, %arg7: memref<1x64xf32, #tpu.memory_space<vmem>>, %arg8: memref<1x1xf32, #tpu.memory_space<vmem>>, %arg9: memref<8x1xf32, #tpu.memory_space<vmem>>) attributes {dimension_semantics = [], scalar_prefetch = 0 : i64, scratch_operands = 0 : i64, tpu.core_type = #tpu.core_type<tc>} {
    %c0 = arith.constant 0 : index
    %c0_0 = arith.constant 0 : index
    %0 = vector.load %arg0[%c0, %c0_0] : memref<64x16xf32, #tpu.memory_space<vmem>>, vector<64x16xf32>
    %c0_1 = arith.constant 0 : index
    %c0_2 = arith.constant 0 : index
    %1 = vector.load %arg1[%c0_1, %c0_2] : memref<16x128xf32, #tpu.memory_space<vmem>>, vector<16x128xf32>
    %cst = arith.constant dense<0.000000e+00> : vector<64x128xf32>
    %2 = tpu.matmul %0, %1, %cst {dimension_numbers = #tpu.dot_dimension_numbers<[1], [0], [0], [1], [0, 0, 1, 1], [], []>} : vector<64x16xf32>, vector<16x128xf32>, vector<64x128xf32> -> vector<64x128xf32>
    %c0_3 = arith.constant 0 : index
    %c0_4 = arith.constant 0 : index
    %3 = vector.load %arg2[%c0_3, %c0_4] : memref<1x128xf32, #tpu.memory_space<vmem>>, vector<1x128xf32>
    %4 = vector.broadcast %3 : vector<1x128xf32> to vector<64x128xf32>
    %5 = arith.addf %2, %4 : vector<64x128xf32>
    %c0_5 = arith.constant 0 : index
    %c0_6 = arith.constant 0 : index
    %6 = vector.load %arg3[%c0_5, %c0_6] : memref<64x256xf32, #tpu.memory_space<vmem>>, vector<64x256xf32>
    %c0_7 = arith.constant 0 : index
    %c0_8 = arith.constant 0 : index
    %7 = vector.load %arg4[%c0_7, %c0_8] : memref<1x128xf32, #tpu.memory_space<vmem>>, vector<1x128xf32>
    %8 = vector.shape_cast %7 : vector<1x128xf32> to vector<1x128xf32>
    %9 = vector.broadcast %8 : vector<1x128xf32> to vector<8x128xf32>
    %cst_9 = arith.constant 0.000000e+00 : f32
    %10 = vector.broadcast %cst_9 : f32 to vector<8x32xf32>
    %11 = vector.extract_strided_slice %5 {offsets = [0, 0], sizes = [8, 128], strides = [1, 1]} : vector<64x128xf32> to vector<8x128xf32>
    %12 = arith.negf %11 : vector<8x128xf32>
    %13 = math.exp %12 : vector<8x128xf32>
    %cst_10 = arith.constant 1.000000e+00 : f32
    %14 = vector.broadcast %cst_10 : f32 to vector<8x128xf32>
    %15 = arith.addf %14, %13 : vector<8x128xf32>
    %16 = arith.divf %14, %15 : vector<8x128xf32>
    %17 = math.tanh %11 : vector<8x128xf32>
    %18 = vector.extract_strided_slice %16 {offsets = [0, 0], sizes = [8, 32], strides = [1, 1]} : vector<8x128xf32> to vector<8x32xf32>
    %19 = vector.extract_strided_slice %16 {offsets = [0, 32], sizes = [8, 32], strides = [1, 1]} : vector<8x128xf32> to vector<8x32xf32>
    %20 = vector.extract_strided_slice %16 {offsets = [0, 64], sizes = [8, 32], strides = [1, 1]} : vector<8x128xf32> to vector<8x32xf32>
    %21 = vector.extract_strided_slice %17 {offsets = [0, 96], sizes = [8, 32], strides = [1, 1]} : vector<8x128xf32> to vector<8x32xf32>
    %22 = arith.mulf %19, %10 : vector<8x32xf32>
    %23 = arith.mulf %18, %21 : vector<8x32xf32>
    %24 = arith.addf %22, %23 : vector<8x32xf32>
    %25 = math.tanh %24 : vector<8x32xf32>
    %26 = arith.mulf %20, %25 : vector<8x32xf32>
    %27 = tpu.concatenate %26, %10 in 1 : vector<8x32xf32>, vector<8x32xf32> -> vector<8x64xf32>
    %cst_11 = arith.constant dense<0.000000e+00> : vector<8x256xf32>
    %28 = tpu.matmul %27, %6, %cst_11 {dimension_numbers = #tpu.dot_dimension_numbers<[1], [0], [0], [1], [0, 0, 1, 1], [], []>} : vector<8x64xf32>, vector<64x256xf32>, vector<8x256xf32> -> vector<8x256xf32>
    %29 = vector.extract_strided_slice %28 {offsets = [0, 128], sizes = [8, 128], strides = [1, 1]} : vector<8x256xf32> to vector<8x128xf32>
    %30 = arith.addf %29, %9 : vector<8x128xf32>
    %31 = arith.negf %30 : vector<8x128xf32>
    %32 = math.exp %31 : vector<8x128xf32>
    %cst_12 = arith.constant 1.000000e+00 : f32
    %33 = vector.broadcast %cst_12 : f32 to vector<8x128xf32>
    %34 = arith.addf %33, %32 : vector<8x128xf32>
    %35 = arith.divf %33, %34 : vector<8x128xf32>
    %36 = math.tanh %30 : vector<8x128xf32>
    %37 = vector.extract_strided_slice %35 {offsets = [0, 0], sizes = [8, 32], strides = [1, 1]} : vector<8x128xf32> to vector<8x32xf32>
    %38 = vector.extract_strided_slice %35 {offsets = [0, 32], sizes = [8, 32], strides = [1, 1]} : vector<8x128xf32> to vector<8x32xf32>
    %39 = vector.extract_strided_slice %35 {offsets = [0, 64], sizes = [8, 32], strides = [1, 1]} : vector<8x128xf32> to vector<8x32xf32>
    %40 = vector.extract_strided_slice %36 {offsets = [0, 96], sizes = [8, 32], strides = [1, 1]} : vector<8x128xf32> to vector<8x32xf32>
    %41 = arith.mulf %38, %10 : vector<8x32xf32>
    %42 = arith.mulf %37, %40 : vector<8x32xf32>
    %43 = arith.addf %41, %42 : vector<8x32xf32>
    %44 = math.tanh %43 : vector<8x32xf32>
    %45 = arith.mulf %39, %44 : vector<8x32xf32>
    %46 = vector.extract_strided_slice %5 {offsets = [8, 0], sizes = [8, 128], strides = [1, 1]} : vector<64x128xf32> to vector<8x128xf32>
    %47 = vector.extract_strided_slice %28 {offsets = [0, 0], sizes = [8, 128], strides = [1, 1]} : vector<8x256xf32> to vector<8x128xf32>
    %48 = arith.addf %46, %47 : vector<8x128xf32>
    %49 = arith.negf %48 : vector<8x128xf32>
    %50 = math.exp %49 : vector<8x128xf32>
    %cst_13 = arith.constant 1.000000e+00 : f32
    %51 = vector.broadcast %cst_13 : f32 to vector<8x128xf32>
    %52 = arith.addf %51, %50 : vector<8x128xf32>
    %53 = arith.divf %51, %52 : vector<8x128xf32>
    %54 = math.tanh %48 : vector<8x128xf32>
    %55 = vector.extract_strided_slice %53 {offsets = [0, 0], sizes = [8, 32], strides = [1, 1]} : vector<8x128xf32> to vector<8x32xf32>
    %56 = vector.extract_strided_slice %53 {offsets = [0, 32], sizes = [8, 32], strides = [1, 1]} : vector<8x128xf32> to vector<8x32xf32>
    %57 = vector.extract_strided_slice %53 {offsets = [0, 64], sizes = [8, 32], strides = [1, 1]} : vector<8x128xf32> to vector<8x32xf32>
    %58 = vector.extract_strided_slice %54 {offsets = [0, 96], sizes = [8, 32], strides = [1, 1]} : vector<8x128xf32> to vector<8x32xf32>
    %59 = arith.mulf %56, %24 : vector<8x32xf32>
    %60 = arith.mulf %55, %58 : vector<8x32xf32>
    %61 = arith.addf %59, %60 : vector<8x32xf32>
    %62 = math.tanh %61 : vector<8x32xf32>
    %63 = arith.mulf %57, %62 : vector<8x32xf32>
    %64 = tpu.concatenate %63, %45 in 1 : vector<8x32xf32>, vector<8x32xf32> -> vector<8x64xf32>
    %cst_14 = arith.constant dense<0.000000e+00> : vector<8x256xf32>
    %65 = tpu.matmul %64, %6, %cst_14 {dimension_numbers = #tpu.dot_dimension_numbers<[1], [0], [0], [1], [0, 0, 1, 1], [], []>} : vector<8x64xf32>, vector<64x256xf32>, vector<8x256xf32> -> vector<8x256xf32>
    %66 = vector.extract_strided_slice %65 {offsets = [0, 128], sizes = [8, 128], strides = [1, 1]} : vector<8x256xf32> to vector<8x128xf32>
    %67 = arith.addf %66, %9 : vector<8x128xf32>
    %68 = arith.negf %67 : vector<8x128xf32>
    %69 = math.exp %68 : vector<8x128xf32>
    %cst_15 = arith.constant 1.000000e+00 : f32
    %70 = vector.broadcast %cst_15 : f32 to vector<8x128xf32>
    %71 = arith.addf %70, %69 : vector<8x128xf32>
    %72 = arith.divf %70, %71 : vector<8x128xf32>
    %73 = math.tanh %67 : vector<8x128xf32>
    %74 = vector.extract_strided_slice %72 {offsets = [0, 0], sizes = [8, 32], strides = [1, 1]} : vector<8x128xf32> to vector<8x32xf32>
    %75 = vector.extract_strided_slice %72 {offsets = [0, 32], sizes = [8, 32], strides = [1, 1]} : vector<8x128xf32> to vector<8x32xf32>
    %76 = vector.extract_strided_slice %72 {offsets = [0, 64], sizes = [8, 32], strides = [1, 1]} : vector<8x128xf32> to vector<8x32xf32>
    %77 = vector.extract_strided_slice %73 {offsets = [0, 96], sizes = [8, 32], strides = [1, 1]} : vector<8x128xf32> to vector<8x32xf32>
    %78 = arith.mulf %75, %43 : vector<8x32xf32>
    %79 = arith.mulf %74, %77 : vector<8x32xf32>
    %80 = arith.addf %78, %79 : vector<8x32xf32>
    %81 = math.tanh %80 : vector<8x32xf32>
    %82 = arith.mulf %76, %81 : vector<8x32xf32>
    %83 = vector.extract_strided_slice %5 {offsets = [16, 0], sizes = [8, 128], strides = [1, 1]} : vector<64x128xf32> to vector<8x128xf32>
    %84 = vector.extract_strided_slice %65 {offsets = [0, 0], sizes = [8, 128], strides = [1, 1]} : vector<8x256xf32> to vector<8x128xf32>
    %85 = arith.addf %83, %84 : vector<8x128xf32>
    %86 = arith.negf %85 : vector<8x128xf32>
    %87 = math.exp %86 : vector<8x128xf32>
    %cst_16 = arith.constant 1.000000e+00 : f32
    %88 = vector.broadcast %cst_16 : f32 to vector<8x128xf32>
    %89 = arith.addf %88, %87 : vector<8x128xf32>
    %90 = arith.divf %88, %89 : vector<8x128xf32>
    %91 = math.tanh %85 : vector<8x128xf32>
    %92 = vector.extract_strided_slice %90 {offsets = [0, 0], sizes = [8, 32], strides = [1, 1]} : vector<8x128xf32> to vector<8x32xf32>
    %93 = vector.extract_strided_slice %90 {offsets = [0, 32], sizes = [8, 32], strides = [1, 1]} : vector<8x128xf32> to vector<8x32xf32>
    %94 = vector.extract_strided_slice %90 {offsets = [0, 64], sizes = [8, 32], strides = [1, 1]} : vector<8x128xf32> to vector<8x32xf32>
    %95 = vector.extract_strided_slice %91 {offsets = [0, 96], sizes = [8, 32], strides = [1, 1]} : vector<8x128xf32> to vector<8x32xf32>
    %96 = arith.mulf %93, %61 : vector<8x32xf32>
    %97 = arith.mulf %92, %95 : vector<8x32xf32>
    %98 = arith.addf %96, %97 : vector<8x32xf32>
    %99 = math.tanh %98 : vector<8x32xf32>
    %100 = arith.mulf %94, %99 : vector<8x32xf32>
    %101 = tpu.concatenate %100, %82 in 1 : vector<8x32xf32>, vector<8x32xf32> -> vector<8x64xf32>
    %cst_17 = arith.constant dense<0.000000e+00> : vector<8x256xf32>
    %102 = tpu.matmul %101, %6, %cst_17 {dimension_numbers = #tpu.dot_dimension_numbers<[1], [0], [0], [1], [0, 0, 1, 1], [], []>} : vector<8x64xf32>, vector<64x256xf32>, vector<8x256xf32> -> vector<8x256xf32>
    %103 = vector.extract_strided_slice %102 {offsets = [0, 128], sizes = [8, 128], strides = [1, 1]} : vector<8x256xf32> to vector<8x128xf32>
    %104 = arith.addf %103, %9 : vector<8x128xf32>
    %105 = arith.negf %104 : vector<8x128xf32>
    %106 = math.exp %105 : vector<8x128xf32>
    %cst_18 = arith.constant 1.000000e+00 : f32
    %107 = vector.broadcast %cst_18 : f32 to vector<8x128xf32>
    %108 = arith.addf %107, %106 : vector<8x128xf32>
    %109 = arith.divf %107, %108 : vector<8x128xf32>
    %110 = math.tanh %104 : vector<8x128xf32>
    %111 = vector.extract_strided_slice %109 {offsets = [0, 0], sizes = [8, 32], strides = [1, 1]} : vector<8x128xf32> to vector<8x32xf32>
    %112 = vector.extract_strided_slice %109 {offsets = [0, 32], sizes = [8, 32], strides = [1, 1]} : vector<8x128xf32> to vector<8x32xf32>
    %113 = vector.extract_strided_slice %109 {offsets = [0, 64], sizes = [8, 32], strides = [1, 1]} : vector<8x128xf32> to vector<8x32xf32>
    %114 = vector.extract_strided_slice %110 {offsets = [0, 96], sizes = [8, 32], strides = [1, 1]} : vector<8x128xf32> to vector<8x32xf32>
    %115 = arith.mulf %112, %80 : vector<8x32xf32>
    %116 = arith.mulf %111, %114 : vector<8x32xf32>
    %117 = arith.addf %115, %116 : vector<8x32xf32>
    %118 = math.tanh %117 : vector<8x32xf32>
    %119 = arith.mulf %113, %118 : vector<8x32xf32>
    %120 = vector.extract_strided_slice %5 {offsets = [24, 0], sizes = [8, 128], strides = [1, 1]} : vector<64x128xf32> to vector<8x128xf32>
    %121 = vector.extract_strided_slice %102 {offsets = [0, 0], sizes = [8, 128], strides = [1, 1]} : vector<8x256xf32> to vector<8x128xf32>
    %122 = arith.addf %120, %121 : vector<8x128xf32>
    %123 = arith.negf %122 : vector<8x128xf32>
    %124 = math.exp %123 : vector<8x128xf32>
    %cst_19 = arith.constant 1.000000e+00 : f32
    %125 = vector.broadcast %cst_19 : f32 to vector<8x128xf32>
    %126 = arith.addf %125, %124 : vector<8x128xf32>
    %127 = arith.divf %125, %126 : vector<8x128xf32>
    %128 = math.tanh %122 : vector<8x128xf32>
    %129 = vector.extract_strided_slice %127 {offsets = [0, 0], sizes = [8, 32], strides = [1, 1]} : vector<8x128xf32> to vector<8x32xf32>
    %130 = vector.extract_strided_slice %127 {offsets = [0, 32], sizes = [8, 32], strides = [1, 1]} : vector<8x128xf32> to vector<8x32xf32>
    %131 = vector.extract_strided_slice %127 {offsets = [0, 64], sizes = [8, 32], strides = [1, 1]} : vector<8x128xf32> to vector<8x32xf32>
    %132 = vector.extract_strided_slice %128 {offsets = [0, 96], sizes = [8, 32], strides = [1, 1]} : vector<8x128xf32> to vector<8x32xf32>
    %133 = arith.mulf %130, %98 : vector<8x32xf32>
    %134 = arith.mulf %129, %132 : vector<8x32xf32>
    %135 = arith.addf %133, %134 : vector<8x32xf32>
    %136 = math.tanh %135 : vector<8x32xf32>
    %137 = arith.mulf %131, %136 : vector<8x32xf32>
    %138 = tpu.concatenate %137, %119 in 1 : vector<8x32xf32>, vector<8x32xf32> -> vector<8x64xf32>
    %cst_20 = arith.constant dense<0.000000e+00> : vector<8x256xf32>
    %139 = tpu.matmul %138, %6, %cst_20 {dimension_numbers = #tpu.dot_dimension_numbers<[1], [0], [0], [1], [0, 0, 1, 1], [], []>} : vector<8x64xf32>, vector<64x256xf32>, vector<8x256xf32> -> vector<8x256xf32>
    %140 = vector.extract_strided_slice %139 {offsets = [0, 128], sizes = [8, 128], strides = [1, 1]} : vector<8x256xf32> to vector<8x128xf32>
    %141 = arith.addf %140, %9 : vector<8x128xf32>
    %142 = arith.negf %141 : vector<8x128xf32>
    %143 = math.exp %142 : vector<8x128xf32>
    %cst_21 = arith.constant 1.000000e+00 : f32
    %144 = vector.broadcast %cst_21 : f32 to vector<8x128xf32>
    %145 = arith.addf %144, %143 : vector<8x128xf32>
    %146 = arith.divf %144, %145 : vector<8x128xf32>
    %147 = math.tanh %141 : vector<8x128xf32>
    %148 = vector.extract_strided_slice %146 {offsets = [0, 0], sizes = [8, 32], strides = [1, 1]} : vector<8x128xf32> to vector<8x32xf32>
    %149 = vector.extract_strided_slice %146 {offsets = [0, 32], sizes = [8, 32], strides = [1, 1]} : vector<8x128xf32> to vector<8x32xf32>
    %150 = vector.extract_strided_slice %146 {offsets = [0, 64], sizes = [8, 32], strides = [1, 1]} : vector<8x128xf32> to vector<8x32xf32>
    %151 = vector.extract_strided_slice %147 {offsets = [0, 96], sizes = [8, 32], strides = [1, 1]} : vector<8x128xf32> to vector<8x32xf32>
    %152 = arith.mulf %149, %117 : vector<8x32xf32>
    %153 = arith.mulf %148, %151 : vector<8x32xf32>
    %154 = arith.addf %152, %153 : vector<8x32xf32>
    %155 = math.tanh %154 : vector<8x32xf32>
    %156 = arith.mulf %150, %155 : vector<8x32xf32>
    %157 = vector.extract_strided_slice %5 {offsets = [32, 0], sizes = [8, 128], strides = [1, 1]} : vector<64x128xf32> to vector<8x128xf32>
    %158 = vector.extract_strided_slice %139 {offsets = [0, 0], sizes = [8, 128], strides = [1, 1]} : vector<8x256xf32> to vector<8x128xf32>
    %159 = arith.addf %157, %158 : vector<8x128xf32>
    %160 = arith.negf %159 : vector<8x128xf32>
    %161 = math.exp %160 : vector<8x128xf32>
    %cst_22 = arith.constant 1.000000e+00 : f32
    %162 = vector.broadcast %cst_22 : f32 to vector<8x128xf32>
    %163 = arith.addf %162, %161 : vector<8x128xf32>
    %164 = arith.divf %162, %163 : vector<8x128xf32>
    %165 = math.tanh %159 : vector<8x128xf32>
    %166 = vector.extract_strided_slice %164 {offsets = [0, 0], sizes = [8, 32], strides = [1, 1]} : vector<8x128xf32> to vector<8x32xf32>
    %167 = vector.extract_strided_slice %164 {offsets = [0, 32], sizes = [8, 32], strides = [1, 1]} : vector<8x128xf32> to vector<8x32xf32>
    %168 = vector.extract_strided_slice %164 {offsets = [0, 64], sizes = [8, 32], strides = [1, 1]} : vector<8x128xf32> to vector<8x32xf32>
    %169 = vector.extract_strided_slice %165 {offsets = [0, 96], sizes = [8, 32], strides = [1, 1]} : vector<8x128xf32> to vector<8x32xf32>
    %170 = arith.mulf %167, %135 : vector<8x32xf32>
    %171 = arith.mulf %166, %169 : vector<8x32xf32>
    %172 = arith.addf %170, %171 : vector<8x32xf32>
    %173 = math.tanh %172 : vector<8x32xf32>
    %174 = arith.mulf %168, %173 : vector<8x32xf32>
    %175 = tpu.concatenate %174, %156 in 1 : vector<8x32xf32>, vector<8x32xf32> -> vector<8x64xf32>
    %cst_23 = arith.constant dense<0.000000e+00> : vector<8x256xf32>
    %176 = tpu.matmul %175, %6, %cst_23 {dimension_numbers = #tpu.dot_dimension_numbers<[1], [0], [0], [1], [0, 0, 1, 1], [], []>} : vector<8x64xf32>, vector<64x256xf32>, vector<8x256xf32> -> vector<8x256xf32>
    %177 = vector.extract_strided_slice %176 {offsets = [0, 128], sizes = [8, 128], strides = [1, 1]} : vector<8x256xf32> to vector<8x128xf32>
    %178 = arith.addf %177, %9 : vector<8x128xf32>
    %179 = arith.negf %178 : vector<8x128xf32>
    %180 = math.exp %179 : vector<8x128xf32>
    %cst_24 = arith.constant 1.000000e+00 : f32
    %181 = vector.broadcast %cst_24 : f32 to vector<8x128xf32>
    %182 = arith.addf %181, %180 : vector<8x128xf32>
    %183 = arith.divf %181, %182 : vector<8x128xf32>
    %184 = math.tanh %178 : vector<8x128xf32>
    %185 = vector.extract_strided_slice %183 {offsets = [0, 0], sizes = [8, 32], strides = [1, 1]} : vector<8x128xf32> to vector<8x32xf32>
    %186 = vector.extract_strided_slice %183 {offsets = [0, 32], sizes = [8, 32], strides = [1, 1]} : vector<8x128xf32> to vector<8x32xf32>
    %187 = vector.extract_strided_slice %183 {offsets = [0, 64], sizes = [8, 32], strides = [1, 1]} : vector<8x128xf32> to vector<8x32xf32>
    %188 = vector.extract_strided_slice %184 {offsets = [0, 96], sizes = [8, 32], strides = [1, 1]} : vector<8x128xf32> to vector<8x32xf32>
    %189 = arith.mulf %186, %154 : vector<8x32xf32>
    %190 = arith.mulf %185, %188 : vector<8x32xf32>
    %191 = arith.addf %189, %190 : vector<8x32xf32>
    %192 = math.tanh %191 : vector<8x32xf32>
    %193 = arith.mulf %187, %192 : vector<8x32xf32>
    %194 = vector.extract_strided_slice %5 {offsets = [40, 0], sizes = [8, 128], strides = [1, 1]} : vector<64x128xf32> to vector<8x128xf32>
    %195 = vector.extract_strided_slice %176 {offsets = [0, 0], sizes = [8, 128], strides = [1, 1]} : vector<8x256xf32> to vector<8x128xf32>
    %196 = arith.addf %194, %195 : vector<8x128xf32>
    %197 = arith.negf %196 : vector<8x128xf32>
    %198 = math.exp %197 : vector<8x128xf32>
    %cst_25 = arith.constant 1.000000e+00 : f32
    %199 = vector.broadcast %cst_25 : f32 to vector<8x128xf32>
    %200 = arith.addf %199, %198 : vector<8x128xf32>
    %201 = arith.divf %199, %200 : vector<8x128xf32>
    %202 = math.tanh %196 : vector<8x128xf32>
    %203 = vector.extract_strided_slice %201 {offsets = [0, 0], sizes = [8, 32], strides = [1, 1]} : vector<8x128xf32> to vector<8x32xf32>
    %204 = vector.extract_strided_slice %201 {offsets = [0, 32], sizes = [8, 32], strides = [1, 1]} : vector<8x128xf32> to vector<8x32xf32>
    %205 = vector.extract_strided_slice %201 {offsets = [0, 64], sizes = [8, 32], strides = [1, 1]} : vector<8x128xf32> to vector<8x32xf32>
    %206 = vector.extract_strided_slice %202 {offsets = [0, 96], sizes = [8, 32], strides = [1, 1]} : vector<8x128xf32> to vector<8x32xf32>
    %207 = arith.mulf %204, %172 : vector<8x32xf32>
    %208 = arith.mulf %203, %206 : vector<8x32xf32>
    %209 = arith.addf %207, %208 : vector<8x32xf32>
    %210 = math.tanh %209 : vector<8x32xf32>
    %211 = arith.mulf %205, %210 : vector<8x32xf32>
    %212 = tpu.concatenate %211, %193 in 1 : vector<8x32xf32>, vector<8x32xf32> -> vector<8x64xf32>
    %cst_26 = arith.constant dense<0.000000e+00> : vector<8x256xf32>
    %213 = tpu.matmul %212, %6, %cst_26 {dimension_numbers = #tpu.dot_dimension_numbers<[1], [0], [0], [1], [0, 0, 1, 1], [], []>} : vector<8x64xf32>, vector<64x256xf32>, vector<8x256xf32> -> vector<8x256xf32>
    %214 = vector.extract_strided_slice %213 {offsets = [0, 128], sizes = [8, 128], strides = [1, 1]} : vector<8x256xf32> to vector<8x128xf32>
    %215 = arith.addf %214, %9 : vector<8x128xf32>
    %216 = arith.negf %215 : vector<8x128xf32>
    %217 = math.exp %216 : vector<8x128xf32>
    %cst_27 = arith.constant 1.000000e+00 : f32
    %218 = vector.broadcast %cst_27 : f32 to vector<8x128xf32>
    %219 = arith.addf %218, %217 : vector<8x128xf32>
    %220 = arith.divf %218, %219 : vector<8x128xf32>
    %221 = math.tanh %215 : vector<8x128xf32>
    %222 = vector.extract_strided_slice %220 {offsets = [0, 0], sizes = [8, 32], strides = [1, 1]} : vector<8x128xf32> to vector<8x32xf32>
    %223 = vector.extract_strided_slice %220 {offsets = [0, 32], sizes = [8, 32], strides = [1, 1]} : vector<8x128xf32> to vector<8x32xf32>
    %224 = vector.extract_strided_slice %220 {offsets = [0, 64], sizes = [8, 32], strides = [1, 1]} : vector<8x128xf32> to vector<8x32xf32>
    %225 = vector.extract_strided_slice %221 {offsets = [0, 96], sizes = [8, 32], strides = [1, 1]} : vector<8x128xf32> to vector<8x32xf32>
    %226 = arith.mulf %223, %191 : vector<8x32xf32>
    %227 = arith.mulf %222, %225 : vector<8x32xf32>
    %228 = arith.addf %226, %227 : vector<8x32xf32>
    %229 = math.tanh %228 : vector<8x32xf32>
    %230 = arith.mulf %224, %229 : vector<8x32xf32>
    %231 = vector.extract_strided_slice %5 {offsets = [48, 0], sizes = [8, 128], strides = [1, 1]} : vector<64x128xf32> to vector<8x128xf32>
    %232 = vector.extract_strided_slice %213 {offsets = [0, 0], sizes = [8, 128], strides = [1, 1]} : vector<8x256xf32> to vector<8x128xf32>
    %233 = arith.addf %231, %232 : vector<8x128xf32>
    %234 = arith.negf %233 : vector<8x128xf32>
    %235 = math.exp %234 : vector<8x128xf32>
    %cst_28 = arith.constant 1.000000e+00 : f32
    %236 = vector.broadcast %cst_28 : f32 to vector<8x128xf32>
    %237 = arith.addf %236, %235 : vector<8x128xf32>
    %238 = arith.divf %236, %237 : vector<8x128xf32>
    %239 = math.tanh %233 : vector<8x128xf32>
    %240 = vector.extract_strided_slice %238 {offsets = [0, 0], sizes = [8, 32], strides = [1, 1]} : vector<8x128xf32> to vector<8x32xf32>
    %241 = vector.extract_strided_slice %238 {offsets = [0, 32], sizes = [8, 32], strides = [1, 1]} : vector<8x128xf32> to vector<8x32xf32>
    %242 = vector.extract_strided_slice %238 {offsets = [0, 64], sizes = [8, 32], strides = [1, 1]} : vector<8x128xf32> to vector<8x32xf32>
    %243 = vector.extract_strided_slice %239 {offsets = [0, 96], sizes = [8, 32], strides = [1, 1]} : vector<8x128xf32> to vector<8x32xf32>
    %244 = arith.mulf %241, %209 : vector<8x32xf32>
    %245 = arith.mulf %240, %243 : vector<8x32xf32>
    %246 = arith.addf %244, %245 : vector<8x32xf32>
    %247 = math.tanh %246 : vector<8x32xf32>
    %248 = arith.mulf %242, %247 : vector<8x32xf32>
    %249 = tpu.concatenate %248, %230 in 1 : vector<8x32xf32>, vector<8x32xf32> -> vector<8x64xf32>
    %cst_29 = arith.constant dense<0.000000e+00> : vector<8x256xf32>
    %250 = tpu.matmul %249, %6, %cst_29 {dimension_numbers = #tpu.dot_dimension_numbers<[1], [0], [0], [1], [0, 0, 1, 1], [], []>} : vector<8x64xf32>, vector<64x256xf32>, vector<8x256xf32> -> vector<8x256xf32>
    %251 = vector.extract_strided_slice %250 {offsets = [0, 128], sizes = [8, 128], strides = [1, 1]} : vector<8x256xf32> to vector<8x128xf32>
    %252 = arith.addf %251, %9 : vector<8x128xf32>
    %253 = arith.negf %252 : vector<8x128xf32>
    %254 = math.exp %253 : vector<8x128xf32>
    %cst_30 = arith.constant 1.000000e+00 : f32
    %255 = vector.broadcast %cst_30 : f32 to vector<8x128xf32>
    %256 = arith.addf %255, %254 : vector<8x128xf32>
    %257 = arith.divf %255, %256 : vector<8x128xf32>
    %258 = math.tanh %252 : vector<8x128xf32>
    %259 = vector.extract_strided_slice %257 {offsets = [0, 0], sizes = [8, 32], strides = [1, 1]} : vector<8x128xf32> to vector<8x32xf32>
    %260 = vector.extract_strided_slice %257 {offsets = [0, 32], sizes = [8, 32], strides = [1, 1]} : vector<8x128xf32> to vector<8x32xf32>
    %261 = vector.extract_strided_slice %257 {offsets = [0, 64], sizes = [8, 32], strides = [1, 1]} : vector<8x128xf32> to vector<8x32xf32>
    %262 = vector.extract_strided_slice %258 {offsets = [0, 96], sizes = [8, 32], strides = [1, 1]} : vector<8x128xf32> to vector<8x32xf32>
    %263 = arith.mulf %260, %228 : vector<8x32xf32>
    %264 = arith.mulf %259, %262 : vector<8x32xf32>
    %265 = arith.addf %263, %264 : vector<8x32xf32>
    %266 = math.tanh %265 : vector<8x32xf32>
    %267 = arith.mulf %261, %266 : vector<8x32xf32>
    %268 = vector.extract_strided_slice %5 {offsets = [56, 0], sizes = [8, 128], strides = [1, 1]} : vector<64x128xf32> to vector<8x128xf32>
    %269 = vector.extract_strided_slice %250 {offsets = [0, 0], sizes = [8, 128], strides = [1, 1]} : vector<8x256xf32> to vector<8x128xf32>
    %270 = arith.addf %268, %269 : vector<8x128xf32>
    %271 = arith.negf %270 : vector<8x128xf32>
    %272 = math.exp %271 : vector<8x128xf32>
    %cst_31 = arith.constant 1.000000e+00 : f32
    %273 = vector.broadcast %cst_31 : f32 to vector<8x128xf32>
    %274 = arith.addf %273, %272 : vector<8x128xf32>
    %275 = arith.divf %273, %274 : vector<8x128xf32>
    %276 = math.tanh %270 : vector<8x128xf32>
    %277 = vector.extract_strided_slice %275 {offsets = [0, 0], sizes = [8, 32], strides = [1, 1]} : vector<8x128xf32> to vector<8x32xf32>
    %278 = vector.extract_strided_slice %275 {offsets = [0, 32], sizes = [8, 32], strides = [1, 1]} : vector<8x128xf32> to vector<8x32xf32>
    %279 = vector.extract_strided_slice %275 {offsets = [0, 64], sizes = [8, 32], strides = [1, 1]} : vector<8x128xf32> to vector<8x32xf32>
    %280 = vector.extract_strided_slice %276 {offsets = [0, 96], sizes = [8, 32], strides = [1, 1]} : vector<8x128xf32> to vector<8x32xf32>
    %281 = arith.mulf %278, %246 : vector<8x32xf32>
    %282 = arith.mulf %277, %280 : vector<8x32xf32>
    %283 = arith.addf %281, %282 : vector<8x32xf32>
    %284 = math.tanh %283 : vector<8x32xf32>
    %285 = arith.mulf %279, %284 : vector<8x32xf32>
    %286 = tpu.concatenate %285, %267 in 1 : vector<8x32xf32>, vector<8x32xf32> -> vector<8x64xf32>
    %cst_32 = arith.constant dense<0.000000e+00> : vector<8x256xf32>
    %287 = tpu.matmul %286, %6, %cst_32 {dimension_numbers = #tpu.dot_dimension_numbers<[1], [0], [0], [1], [0, 0, 1, 1], [], []>} : vector<8x64xf32>, vector<64x256xf32>, vector<8x256xf32> -> vector<8x256xf32>
    %288 = vector.extract_strided_slice %287 {offsets = [0, 128], sizes = [8, 128], strides = [1, 1]} : vector<8x256xf32> to vector<8x128xf32>
    %289 = arith.addf %288, %9 : vector<8x128xf32>
    %290 = arith.negf %289 : vector<8x128xf32>
    %291 = math.exp %290 : vector<8x128xf32>
    %cst_33 = arith.constant 1.000000e+00 : f32
    %292 = vector.broadcast %cst_33 : f32 to vector<8x128xf32>
    %293 = arith.addf %292, %291 : vector<8x128xf32>
    %294 = arith.divf %292, %293 : vector<8x128xf32>
    %295 = math.tanh %289 : vector<8x128xf32>
    %296 = vector.extract_strided_slice %294 {offsets = [0, 0], sizes = [8, 32], strides = [1, 1]} : vector<8x128xf32> to vector<8x32xf32>
    %297 = vector.extract_strided_slice %294 {offsets = [0, 32], sizes = [8, 32], strides = [1, 1]} : vector<8x128xf32> to vector<8x32xf32>
    %298 = vector.extract_strided_slice %294 {offsets = [0, 64], sizes = [8, 32], strides = [1, 1]} : vector<8x128xf32> to vector<8x32xf32>
    %299 = vector.extract_strided_slice %295 {offsets = [0, 96], sizes = [8, 32], strides = [1, 1]} : vector<8x128xf32> to vector<8x32xf32>
    %300 = arith.mulf %297, %265 : vector<8x32xf32>
    %301 = arith.mulf %296, %299 : vector<8x32xf32>
    %302 = arith.addf %300, %301 : vector<8x32xf32>
    %303 = math.tanh %302 : vector<8x32xf32>
    %304 = arith.mulf %298, %303 : vector<8x32xf32>
    %c0_34 = arith.constant 0 : index
    %c0_35 = arith.constant 0 : index
    %305 = vector.load %arg5[%c0_34, %c0_35] : memref<32x64xf32, #tpu.memory_space<vmem>>, vector<32x64xf32>
    %cst_36 = arith.constant dense<0.000000e+00> : vector<8x64xf32>
    %306 = tpu.matmul %304, %305, %cst_36 {dimension_numbers = #tpu.dot_dimension_numbers<[1], [0], [0], [1], [0, 0, 1, 1], [], []>} : vector<8x32xf32>, vector<32x64xf32>, vector<8x64xf32> -> vector<8x64xf32>
    %c0_37 = arith.constant 0 : index
    %c0_38 = arith.constant 0 : index
    %307 = vector.load %arg6[%c0_37, %c0_38] : memref<1x64xf32, #tpu.memory_space<vmem>>, vector<1x64xf32>
    %308 = vector.broadcast %307 : vector<1x64xf32> to vector<8x64xf32>
    %309 = arith.addf %306, %308 : vector<8x64xf32>
    %cst_39 = arith.constant 0.000000e+00 : f32
    %310 = vector.broadcast %cst_39 : f32 to vector<8x64xf32>
    %311 = arith.maximumf %309, %310 : vector<8x64xf32>
    %c0_40 = arith.constant 0 : index
    %c0_41 = arith.constant 0 : index
    %312 = vector.load %arg7[%c0_40, %c0_41] : memref<1x64xf32, #tpu.memory_space<vmem>>, vector<1x64xf32>
    %313 = vector.broadcast %312 : vector<1x64xf32> to vector<8x64xf32>
    %314 = arith.mulf %311, %313 : vector<8x64xf32>
    %cst_42 = arith.constant dense<0.000000e+00> : vector<8xf32>
    %315 = vector.multi_reduction <add>, %314, %cst_42 [1] : vector<8x64xf32> to vector<8xf32>
    %316 = vector.shape_cast %315 : vector<8xf32> to vector<8x1xf32>
    %c0_43 = arith.constant 0 : index
    %c0_44 = arith.constant 0 : index
    %317 = vector.load %arg8[%c0_43, %c0_44] : memref<1x1xf32, #tpu.memory_space<vmem>>, vector<1x1xf32>
    %318 = vector.broadcast %317 : vector<1x1xf32> to vector<8x1xf32>
    %319 = arith.addf %316, %318 : vector<8x1xf32>
    %c0_45 = arith.constant 0 : index
    %c0_46 = arith.constant 0 : index
    %320 = vector.load %arg9[%c0_45, %c0_46] : memref<8x1xf32, #tpu.memory_space<vmem>>, vector<8x1xf32>
    tpu.vector_store %arg9[%c0_45, %c0_46], %319 {strides = array<i32>} : memref<8x1xf32, #tpu.memory_space<vmem>>, vector<8x1xf32>,
    return
  }
}

</mosaic_0001>

<llo_original>
// kernel: tpu_custom_call.1
$region0: #{tpu_custom_call.1}
  #allocation0 [shape = 'u32[]', space=smem, size = 0x4, offset = 0x4, fixed_abs, tag = 'smem constant byte address 0x4 - core index']
  #allocation1 [shape = 'u32[72,128]{1,0:T(1,128)}', space=vmem, size = 0x9000, scoped, tag = 'internal scratch']
  #allocation2 [shape = 'f32[1,1]{1,0:T(1,128)S(1)}', space=vmem, size = 0x200, scoped, tag = 'scoped memory for tpu_custom_call.1']
  %s0 = inlined_call_operand.vmem [shape: f32[64,16], index: 0, kind: input, shape index: {}]
  %s1 = inlined_call_operand.vmem [shape: f32[16,128], index: 1, kind: input, shape index: {}]
  %s2 = inlined_call_operand.vmem [shape: f32[1,128], index: 2, kind: input, shape index: {}]
  %s3 = inlined_call_operand.hbm [shape: f32[64,256], index: 3, kind: input, shape index: {}]
  %s4 = inlined_call_operand.vmem [shape: f32[1,128], index: 4, kind: input, shape index: {}]
  %s5 = inlined_call_operand.vmem [shape: f32[32,64], index: 5, kind: input, shape index: {}]
  %s6 = inlined_call_operand.vmem [shape: f32[1,64], index: 6, kind: input, shape index: {}]
  %s7 = inlined_call_operand.vmem [shape: f32[1,64], index: 7, kind: input, shape index: {}]
  %s8 = inlined_call_operand.<no memory space> [shape: f32[1,1], index: 8, kind: input, shape index: {}]
  %s9 = inlined_call_operand.vmem [shape: f32[8,1], index: 9, kind: output, shape index: {}]
  %s10 = sld [smem:[#allocation0]]
  $region50: #{tpu_custom_call.1} parent=0
    _
  %s12 = ssub.s32 1, %s10
  %s13 = scalar_select 0, %s12, %s10
  %v14 = vstv %s8
  %15 = vst [vmem:[#allocation2] sm:$0x1] %v14
  $region1: #{tpu_custom_call.1} parent=0
    #allocation3 [shape = 'u8[65536]{0}', space=vmem, size = 0x10000, scoped, tag = 'input window, operand 3, single buffered']
    #allocation4 [shape = 's32[1]{0}', space=sflag, size = 0x4, scoped, tag = 'scoped memory for tpu_custom_call.1']
    %16 = vsyncpa [#allocation4], 0
    // Predicated region
    $region2: #{tpu_custom_call.1} parent=1 // pred_check
      _
    $region3: #{tpu_custom_call.1} parent=1 // pred_check_branch
      %18 = sbr.rel (0) target = $region5
    $region4: #{tpu_custom_call.1} parent=1 // pred_region
      _
    $region5: #{tpu_custom_call.1} parent=1 // pred_fallthru
      _
    // Predicated region
    $region6: #{tpu_custom_call.1} parent=1 // pred_check
      _
    $region7: #{tpu_custom_call.1} parent=1 // pred_check_branch
      %20 = sbr.rel (0) target = $region9
    $region8: #{tpu_custom_call.1} parent=1 // pred_region
      _
    $region9: #{tpu_custom_call.1} parent=1 // pred_fallthru
      _
    // Predicated region
    $region10: #{tpu_custom_call.1} parent=1 // pred_check
      _
    $region11: #{tpu_custom_call.1} parent=1 // pred_check_branch
      %22 = sbr.rel (0) target = $region13
    $region12: #{tpu_custom_call.1} parent=1 // pred_region
      _
    $region13: #{tpu_custom_call.1} parent=1 // pred_fallthru
      _
    // Predicated region
    $region14: #{tpu_custom_call.1} parent=1 // pred_check
      _
    $region15: #{tpu_custom_call.1} parent=1 // pred_check_branch
      %24 = sbr.rel (0) target = $region17
    $region16: #{tpu_custom_call.1} parent=1 // pred_region
      %26 = vsyncadd [#allocation4], 0
      %s27 = sshll.u32 %s3, 4
      %s28 = int_to_ptr.hbm [resolvable:$true] %s27
      %s29 = sshll.u32 [#allocation3], 4
      %s30 = int_to_ptr.vmem [resolvable:$true] %s29
      %35 = dma.hbm_to_vmem [thread:$0]  %s28, 2048, %s30, [#allocation4], 256, 256, 16
    $region17: #{tpu_custom_call.1} parent=1 // pred_fallthru
      _
    // Predicated region
    $region18: #{tpu_custom_call.1} parent=1 // pred_check
      _
    $region19: #{tpu_custom_call.1} parent=1 // pred_check_branch
      %37 = sbr.rel (0) target = $region21
    $region20: #{tpu_custom_call.1} parent=1 // pred_region
      _
    $region21: #{tpu_custom_call.1} parent=1 // pred_fallthru
      _
    // Predicated region
    $region22: #{tpu_custom_call.1} parent=1 // pred_check
      _
    $region23: #{tpu_custom_call.1} parent=1 // pred_check_branch
      %39 = sbr.rel (0) target = $region25
    $region24: #{tpu_custom_call.1} parent=1 // pred_region
      _
    $region25: #{tpu_custom_call.1} parent=1 // pred_fallthru
      _
    // Predicated region
    $region26: #{tpu_custom_call.1} parent=1 // pred_check
      _
    $region27: #{tpu_custom_call.1} parent=1 // pred_check_branch
      %41 = sbr.rel (0) target = $region29
    $region28: #{tpu_custom_call.1} parent=1 // pred_region
      _
    $region29: #{tpu_custom_call.1} parent=1 // pred_fallthru
      _
    // Predicated region
    $region30: #{tpu_custom_call.1} parent=1 // pred_check
      _
    $region31: #{tpu_custom_call.1} parent=1 // pred_check_branch
      %43 = sbr.rel (0) target = $region33
    $region32: #{tpu_custom_call.1} parent=1 // pred_region
      _
    $region33: #{tpu_custom_call.1} parent=1 // pred_fallthru
      _
    // Predicated region
    $region34: #{tpu_custom_call.1} parent=1 // pred_check
      _
    $region35: #{tpu_custom_call.1} parent=1 // pred_check_branch
      %45 = sbr.rel (0) target = $region37
    $region36: #{tpu_custom_call.1} parent=1 // pred_region
      _
    $region37: #{tpu_custom_call.1} parent=1 // pred_fallthru
      _
    // Predicated region
    $region38: #{tpu_custom_call.1} parent=1 // pred_check
      _
    $region39: #{tpu_custom_call.1} parent=1 // pred_check_branch
      %47 = sbr.rel (0) target = $region41
    $region40: #{tpu_custom_call.1} parent=1 // pred_region
      %49 = dma.done [#allocation4], 2048
    $region41: #{tpu_custom_call.1} parent=1 // pred_fallthru
      _
    %v50 = vld [vmem:[%s0] sm:$0xff]
    %v51 = vld [vmem:[%s0 + $0x8] sm:$0xff]
    %v52 = vld [vmem:[%s0 + $0x10] sm:$0xff]
    %v53 = vld [vmem:[%s0 + $0x18] sm:$0xff]
    %v54 = vld [vmem:[%s0 + $0x20] sm:$0xff]
    %v55 = vld [vmem:[%s0 + $0x28] sm:$0xff]
    %v56 = vld [vmem:[%s0 + $0x30] sm:$0xff]
    %v57 = vld [vmem:[%s0 + $0x38] sm:$0xff]
    %v58 = vld [vmem:[%s1] sm:$0xff]
    %v59 = vld [vmem:[%s1 + $0x8] sm:$0xff]
    %v60 = vld [vmem:[%s2] sm:$0x1]
    %v62 = vperm.slane %v60, 0
    %vm64 = vcmask 130048
    %v66 = vsel %vm64, %v50, 0
    %v69 = vsel %vm64, %v51, 0
    %v72 = vsel %vm64, %v52, 0
    %v75 = vsel %vm64, %v53, 0
    %v78 = vsel %vm64, %v54, 0
    %v81 = vsel %vm64, %v55, 0
    %v84 = vsel %vm64, %v56, 0
    %v87 = vsel %vm64, %v57, 0
    %89 = vmatpush.msra.mxu0 0.0
    %90 = vmatpush.msra.mxu0 0.0
    %91 = vmatpush.msra.mxu0 0.0
    %92 = vmatpush.msra.mxu0 0.0
    %93 = vmatpush.msra.mxu0 0.0
    %94 = vmatpush.msra.mxu0 0.0
    %95 = vmatpush.msra.mxu0 0.0
    %96 = vmatpush.msra.mxu0 0.0
    %97 = vmatpush.msra.mxu0 0.0
    %98 = vmatpush.msra.mxu0 0.0
    %99 = vmatpush.msra.mxu0 0.0
    %100 = vmatpush.msra.mxu0 0.0
    %101 = vmatpush.msra.mxu0 0.0
    %102 = vmatpush.msra.mxu0 0.0
    %103 = vmatpush.msra.mxu0 %v59
    %104 = vmatpush.msra.mxu0 %v58
    %105 = vmatmul.f32.gmra.mxu0 %v66
    %v106 = vpop.f32.mrf.mxu0
    %v107 = vadd.f32 %v62, %v106
    %108 = vmatmul.f32.gmra.mxu0 %v69
    %v109 = vpop.f32.mrf.mxu0
    %v110 = vadd.f32 %v62, %v109
    %111 = vmatmul.f32.gmra.mxu0 %v72
    %v112 = vpop.f32.mrf.mxu0
    %v113 = vadd.f32 %v62, %v112
    %114 = vmatmul.f32.gmra.mxu0 %v75
    %v115 = vpop.f32.mrf.mxu0
    %v116 = vadd.f32 %v62, %v115
    %117 = vmatmul.f32.gmra.mxu0 %v78
    %v118 = vpop.f32.mrf.mxu0
    %v119 = vadd.f32 %v62, %v118
    %120 = vmatmul.f32.gmra.mxu0 %v81
    %v121 = vpop.f32.mrf.mxu0
    %v122 = vadd.f32 %v62, %v121
    %123 = vmatmul.f32.gmra.mxu0 %v84
    %v124 = vpop.f32.mrf.mxu0
    %v125 = vadd.f32 %v62, %v124
    %126 = vmatmul.f32.gmra.mxu0 %v87
    %v127 = vpop.f32.mrf.mxu0
    %v128 = vadd.f32 %v62, %v127
    %129 = vdwg.mxu0
    %v130 = vld [vmem:[#allocation3] sm:$0xff]
    %v131 = vld [vmem:[#allocation3 + $0x8] sm:$0xff]
    %v132 = vld [vmem:[#allocation3 + $0x10] sm:$0xff]
    %v133 = vld [vmem:[#allocation3 + $0x18] sm:$0xff]
    %v134 = vld [vmem:[#allocation3 + $0x20] sm:$0xff]
    %v135 = vld [vmem:[#allocation3 + $0x28] sm:$0xff]
    %v136 = vld [vmem:[#allocation3 + $0x30] sm:$0xff]
    %v137 = vld [vmem:[#allocation3 + $0x38] sm:$0xff]
    %v138 = vld [vmem:[#allocation3 + $0x40] sm:$0xff]
    %v139 = vld [vmem:[#allocation3 + $0x48] sm:$0xff]
    %v140 = vld [vmem:[#allocation3 + $0x50] sm:$0xff]
    %v141 = vld [vmem:[#allocation3 + $0x58] sm:$0xff]
    %v142 = vld [vmem:[#allocation3 + $0x60] sm:$0xff]
    %v143 = vld [vmem:[#allocation3 + $0x68] sm:$0xff]
    %v144 = vld [vmem:[#allocation3 + $0x70] sm:$0xff]
    %v145 = vld [vmem:[#allocation3 + $0x78] sm:$0xff]
    %v146 = vld [vmem:[%s4] sm:$0x1]
    %v148 = vperm.slane %v146, 0
    %v150 = vxor.u32 %v107, 2147483648
    %v151 = vmul.f32 %v150, 1.442695
    %v152 = vpow.pop %v151
    %v153 = vadd.f32 %v152, 1.0
    %v154 = vrcp.pop %v153
    %v155 = vmul.f32 %v153, %v154
    %v156 = vsub.f32 1.0, %v155
    %v157 = vmul.f32 %v154, %v156
    %v158 = vadd.f32 %v154, %v157
    %vm159 = vweird.f32 %v153
    %vm160 = vweird.f32 %v154
    %vm161 = vmor %vm159, %vm160
    %v162 = vsel %vm161, %v154, %v158
    %v163 = vand.u32 2147483647, %v153
    %vm164 = vcmp.eq.f32.partialorder %v163, 8.507059e+37
    %v165 = vand.u32 %v153, 2147483648
    %v166 = vor.u32 1.1754944e-38, %v165
    %v167 = vsel %vm164, %v166, %v162
    %v168 = vmul.f32 1.0, %v167
    %v169 = vtanh.pop %v107
    %v170 = vmul.f32 %v168, 0.0
    %172 = vrot.lane.b32.xlu0 %v169, 32
    %v173 = vpop.permute.xlu0 %172
    %v175 = vmul.f32 %v168, %v173
    %177 = vrot.lane.b32.xlu0 %v175, 32
    %v178 = vpop.permute.xlu0 %177
    %v180 = vadd.f32 %v170, %v178
    %v181 = vtanh.pop %v180
    %183 = vrot.lane.b32.xlu0 %v181, 32
    %v184 = vpop.permute.xlu0 %183
    %v186 = vmul.f32 %v168, %v184
    %188 = vrot.lane.b32.xlu0 %v186, 64
    %v189 = vpop.permute.xlu0 %188
    %vm191 = vcmask 261120
    %v192 = vsel %vm191, %v189, 0.0
    %vm193 = vcmask 523264
    %v195 = vsel %vm193, %v192, 0
    %197 = vmatpush.msra.mxu0 0.0
    %198 = vmatpush.msra.mxu0 0.0
    %199 = vmatpush.msra.mxu0 0.0
    %200 = vmatpush.msra.mxu0 0.0
    %201 = vmatpush.msra.mxu0 0.0
    %202 = vmatpush.msra.mxu0 0.0
    %203 = vmatpush.msra.mxu0 0.0
    %204 = vmatpush.msra.mxu0 0.0
    %205 = vmatpush.msra.mxu0 %v144
    %206 = vmatpush.msra.mxu0 %v142
    %207 = vmatpush.msra.mxu0 %v140
    %208 = vmatpush.msra.mxu0 %v138
    %209 = vmatpush.msra.mxu0 %v136
    %210 = vmatpush.msra.mxu0 %v134
    %211 = vmatpush.msra.mxu0 %v132
    %212 = vmatpush.msra.mxu0 %v130
    %213 = vmatmul.f32.gmra.mxu0 %v195
    %v214 = vpop.f32.mrf.mxu0
    %v215 = vadd.f32 0.0, %v214
    %216 = vdwg.mxu0
    %217 = vmatpush.msra.mxu0 0.0
    %218 = vmatpush.msra.mxu0 0.0
    %219 = vmatpush.msra.mxu0 0.0
    %220 = vmatpush.msra.mxu0 0.0
    %221 = vmatpush.msra.mxu0 0.0
    %222 = vmatpush.msra.mxu0 0.0
    %223 = vmatpush.msra.mxu0 0.0
    %224 = vmatpush.msra.mxu0 0.0
    %225 = vmatpush.msra.mxu0 %v145
    %226 = vmatpush.msra.mxu0 %v143
    %227 = vmatpush.msra.mxu0 %v141
    %228 = vmatpush.msra.mxu0 %v139
    %229 = vmatpush.msra.mxu0 %v137
    %230 = vmatpush.msra.mxu0 %v135
    %231 = vmatpush.msra.mxu0 %v133
    %232 = vmatpush.msra.mxu0 %v131
    %233 = vmatmul.f32.gmra.mxu0 %v195
    %v234 = vpop.f32.mrf.mxu0
    %v235 = vadd.f32 0.0, %v234
    %236 = vdwg.mxu0
    %v237 = vadd.f32 %v235, %v148
    %v238 = vxor.u32 %v237, 2147483648
    %v239 = vmul.f32 %v238, 1.442695
    %v240 = vpow.pop %v239
    %v241 = vadd.f32 %v240, 1.0
    %v242 = vrcp.pop %v241
    %v243 = vmul.f32 %v241, %v242
    %v244 = vsub.f32 1.0, %v243
    %v245 = vmul.f32 %v242, %v244
    %v246 = vadd.f32 %v242, %v245
    %vm247 = vweird.f32 %v241
    %vm248 = vweird.f32 %v242
    %vm249 = vmor %vm247, %vm248
    %v250 = vsel %vm249, %v242, %v246
    %v251 = vand.u32 2147483647, %v241
    %vm252 = vcmp.eq.f32.partialorder %v251, 8.507059e+37
    %v253 = vand.u32 %v241, 2147483648
    %v254 = vor.u32 1.1754944e-38, %v253
    %v255 = vsel %vm252, %v254, %v250
    %v256 = vmul.f32 1.0, %v255
    %v257 = vtanh.pop %v237
    %v258 = vmul.f32 %v256, 0.0
    %260 = vrot.lane.b32.xlu0 %v257, 32
    %v261 = vpop.permute.xlu0 %260
    %v263 = vmul.f32 %v256, %v261
    %265 = vrot.lane.b32.xlu0 %v263, 32
    %v266 = vpop.permute.xlu0 %265
    %v268 = vadd.f32 %v258, %v266
    %v269 = vtanh.pop %v268
    %271 = vrot.lane.b32.xlu0 %v269, 32
    %v272 = vpop.permute.xlu0 %271
    %v274 = vmul.f32 %v256, %v272
    %v275 = vadd.f32 %v110, %v215
    %v276 = vxor.u32 %v275, 2147483648
    %v277 = vmul.f32 %v276, 1.442695
    %v278 = vpow.pop %v277
    %v279 = vadd.f32 %v278, 1.0
    %v280 = vrcp.pop %v279
    %v281 = vmul.f32 %v279, %v280
    %v282 = vsub.f32 1.0, %v281
    %v283 = vmul.f32 %v280, %v282
    %v284 = vadd.f32 %v280, %v283
    %vm285 = vweird.f32 %v279
    %vm286 = vweird.f32 %v280
    %vm287 = vmor %vm285, %vm286
    %v288 = vsel %vm287, %v280, %v284
    %v289 = vand.u32 2147483647, %v279
    %vm290 = vcmp.eq.f32.partialorder %v289, 8.507059e+37
    %v291 = vand.u32 %v279, 2147483648
    %v292 = vor.u32 1.1754944e-38, %v291
    %v293 = vsel %vm290, %v292, %v288
    %v294 = vmul.f32 1.0, %v293
    %v295 = vtanh.pop %v275
    %v296 = vmul.f32 %v294, %v180
    %298 = vrot.lane.b32.xlu0 %v295, 32
    %v299 = vpop.permute.xlu0 %298
    %v301 = vmul.f32 %v294, %v299
    %303 = vrot.lane.b32.xlu0 %v301, 32
    %v304 = vpop.permute.xlu0 %303
    %v306 = vadd.f32 %v296, %v304
    %v307 = vtanh.pop %v306
    %309 = vrot.lane.b32.xlu0 %v307, 32
    %v310 = vpop.permute.xlu0 %309
    %v312 = vmul.f32 %v294, %v310
    %314 = vrot.lane.b32.xlu0 %v312, 64
    %v315 = vpop.permute.xlu0 %314
    %318 = vrot.lane.b32.xlu0 %v274, 96
    %v319 = vpop.permute.xlu0 %318
    %v321 = vsel %vm191, %v315, %v319
    %v323 = vsel %vm193, %v321, 0
    %325 = vmatpush.msra.mxu0 0.0
    %326 = vmatpush.msra.mxu0 0.0
    %327 = vmatpush.msra.mxu0 0.0
    %328 = vmatpush.msra.mxu0 0.0
    %329 = vmatpush.msra.mxu0 0.0
    %330 = vmatpush.msra.mxu0 0.0
    %331 = vmatpush.msra.mxu0 0.0
    %332 = vmatpush.msra.mxu0 0.0
    %333 = vmatpush.msra.mxu0 %v144
    %334 = vmatpush.msra.mxu0 %v142
    %335 = vmatpush.msra.mxu0 %v140
    %336 = vmatpush.msra.mxu0 %v138
    %337 = vmatpush.msra.mxu0 %v136
    %338 = vmatpush.msra.mxu0 %v134
    %339 = vmatpush.msra.mxu0 %v132
    %340 = vmatpush.msra.mxu0 %v130
    %341 = vmatmul.f32.gmra.mxu0 %v323
    %v342 = vpop.f32.mrf.mxu0
    %v343 = vadd.f32 0.0, %v342
    %344 = vdwg.mxu0
    %345 = vmatpush.msra.mxu0 0.0
    %346 = vmatpush.msra.mxu0 0.0
    %347 = vmatpush.msra.mxu0 0.0
    %348 = vmatpush.msra.mxu0 0.0
    %349 = vmatpush.msra.mxu0 0.0
    %350 = vmatpush.msra.mxu0 0.0
    %351 = vmatpush.msra.mxu0 0.0
    %352 = vmatpush.msra.mxu0 0.0
    %353 = vmatpush.msra.mxu0 %v145
    %354 = vmatpush.msra.mxu0 %v143
    %355 = vmatpush.msra.mxu0 %v141
    %356 = vmatpush.msra.mxu0 %v139
    %357 = vmatpush.msra.mxu0 %v137
    %358 = vmatpush.msra.mxu0 %v135
    %359 = vmatpush.msra.mxu0 %v133
    %360 = vmatpush.msra.mxu0 %v131
    %361 = vmatmul.f32.gmra.mxu0 %v323
    %v362 = vpop.f32.mrf.mxu0
    %v363 = vadd.f32 0.0, %v362
    %364 = vdwg.mxu0
    %v365 = vadd.f32 %v363, %v148
    %v366 = vxor.u32 %v365, 2147483648
    %v367 = vmul.f32 %v366, 1.442695
    %v368 = vpow.pop %v367
    %v369 = vadd.f32 %v368, 1.0
    %v370 = vrcp.pop %v369
    %v371 = vmul.f32 %v369, %v370
    %v372 = vsub.f32 1.0, %v371
    %v373 = vmul.f32 %v370, %v372
    %v374 = vadd.f32 %v370, %v373
    %vm375 = vweird.f32 %v369
    %vm376 = vweird.f32 %v370
    %vm377 = vmor %vm375, %vm376
    %v378 = vsel %vm377, %v370, %v374
    %v379 = vand.u32 2147483647, %v369
    %vm380 = vcmp.eq.f32.partialorder %v379, 8.507059e+37
    %v381 = vand.u32 %v369, 2147483648
    %v382 = vor.u32 1.1754944e-38, %v381
    %v383 = vsel %vm380, %v382, %v378
    %v384 = vmul.f32 1.0, %v383
    %v385 = vtanh.pop %v365
    %v386 = vmul.f32 %v384, %v268
    %388 = vrot.lane.b32.xlu0 %v385, 32
    %v389 = vpop.permute.xlu0 %388
    %v391 = vmul.f32 %v384, %v389
    %393 = vrot.lane.b32.xlu0 %v391, 32
    %v394 = vpop.permute.xlu0 %393
    %v396 = vadd.f32 %v386, %v394
    %v397 = vtanh.pop %v396
    %399 = vrot.lane.b32.xlu0 %v397, 32
    %v400 = vpop.permute.xlu0 %399
    %v402 = vmul.f32 %v384, %v400
    %v403 = vadd.f32 %v113, %v343
    %v404 = vxor.u32 %v403, 2147483648
    %v405 = vmul.f32 %v404, 1.442695
    %v406 = vpow.pop %v405
    %v407 = vadd.f32 %v406, 1.0
    %v408 = vrcp.pop %v407
    %v409 = vmul.f32 %v407, %v408
    %v410 = vsub.f32 1.0, %v409
    %v411 = vmul.f32 %v408, %v410
    %v412 = vadd.f32 %v408, %v411
    %vm413 = vweird.f32 %v407
    %vm414 = vweird.f32 %v408
    %vm415 = vmor %vm413, %vm414
    %v416 = vsel %vm415, %v408, %v412
    %v417 = vand.u32 2147483647, %v407
    %vm418 = vcmp.eq.f32.partialorder %v417, 8.507059e+37
    %v419 = vand.u32 %v407, 2147483648
    %v420 = vor.u32 1.1754944e-38, %v419
    %v421 = vsel %vm418, %v420, %v416
    %v422 = vmul.f32 1.0, %v421
    %v423 = vtanh.pop %v403
    %v424 = vmul.f32 %v422, %v306
    %426 = vrot.lane.b32.xlu0 %v423, 32
    %v427 = vpop.permute.xlu0 %426
    %v429 = vmul.f32 %v422, %v427
    %431 = vrot.lane.b32.xlu0 %v429, 32
    %v432 = vpop.permute.xlu0 %431
    %v434 = vadd.f32 %v424, %v432
    %v435 = vtanh.pop %v434
    %437 = vrot.lane.b32.xlu0 %v435, 32
    %v438 = vpop.permute.xlu0 %437
    %v440 = vmul.f32 %v422, %v438
    %442 = vrot.lane.b32.xlu0 %v440, 64
    %v443 = vpop.permute.xlu0 %442
    %446 = vrot.lane.b32.xlu0 %v402, 96
    %v447 = vpop.permute.xlu0 %446
    %v449 = vsel %vm191, %v443, %v447
    %v451 = vsel %vm193, %v449, 0
    %453 = vmatpush.msra.mxu0 0.0
    %454 = vmatpush.msra.mxu0 0.0
    %455 = vmatpush.msra.mxu0 0.0
    %456 = vmatpush.msra.mxu0 0.0
    %457 = vmatpush.msra.mxu0 0.0
    %458 = vmatpush.msra.mxu0 0.0
    %459 = vmatpush.msra.mxu0 0.0
    %460 = vmatpush.msra.mxu0 0.0
    %461 = vmatpush.msra.mxu0 %v144
    %462 = vmatpush.msra.mxu0 %v142
    %463 = vmatpush.msra.mxu0 %v140
    %464 = vmatpush.msra.mxu0 %v138
    %465 = vmatpush.msra.mxu0 %v136
    %466 = vmatpush.msra.mxu0 %v134
    %467 = vmatpush.msra.mxu0 %v132
    %468 = vmatpush.msra.mxu0 %v130
    %469 = vmatmul.f32.gmra.mxu0 %v451
    %v470 = vpop.f32.mrf.mxu0
    %v471 = vadd.f32 0.0, %v470
    %472 = vdwg.mxu0
    %473 = vmatpush.msra.mxu0 0.0
    %474 = vmatpush.msra.mxu0 0.0
    %475 = vmatpush.msra.mxu0 0.0
    %476 = vmatpush.msra.mxu0 0.0
    %477 = vmatpush.msra.mxu0 0.0
    %478 = vmatpush.msra.mxu0 0.0
    %479 = vmatpush.msra.mxu0 0.0
    %480 = vmatpush.msra.mxu0 0.0
    %481 = vmatpush.msra.mxu0 %v145
    %482 = vmatpush.msra.mxu0 %v143
    %483 = vmatpush.msra.mxu0 %v141
    %484 = vmatpush.msra.mxu0 %v139
    %485 = vmatpush.msra.mxu0 %v137
    %486 = vmatpush.msra.mxu0 %v135
    %487 = vmatpush.msra.mxu0 %v133
    %488 = vmatpush.msra.mxu0 %v131
    %489 = vmatmul.f32.gmra.mxu0 %v451
    %v490 = vpop.f32.mrf.mxu0
    %v491 = vadd.f32 0.0, %v490
    %492 = vdwg.mxu0
    %v493 = vadd.f32 %v491, %v148
    %v494 = vxor.u32 %v493, 2147483648
    %v495 = vmul.f32 %v494, 1.442695
    %v496 = vpow.pop %v495
    %v497 = vadd.f32 %v496, 1.0
    %v498 = vrcp.pop %v497
    %v499 = vmul.f32 %v497, %v498
    %v500 = vsub.f32 1.0, %v499
    %v501 = vmul.f32 %v498, %v500
    %v502 = vadd.f32 %v498, %v501
    %vm503 = vweird.f32 %v497
    %vm504 = vweird.f32 %v498
    %vm505 = vmor %vm503, %vm504
    %v506 = vsel %vm505, %v498, %v502
    %v507 = vand.u32 2147483647, %v497
    %vm508 = vcmp.eq.f32.partialorder %v507, 8.507059e+37
    %v509 = vand.u32 %v497, 2147483648
    %v510 = vor.u32 1.1754944e-38, %v509
    %v511 = vsel %vm508, %v510, %v506
    %v512 = vmul.f32 1.0, %v511
    %v513 = vtanh.pop %v493
    %v514 = vmul.f32 %v512, %v396
    %516 = vrot.lane.b32.xlu0 %v513, 32
    %v517 = vpop.permute.xlu0 %516
    %v519 = vmul.f32 %v512, %v517
    %521 = vrot.lane.b32.xlu0 %v519, 32
    %v522 = vpop.permute.xlu0 %521
    %v524 = vadd.f32 %v514, %v522
    %v525 = vtanh.pop %v524
    %527 = vrot.lane.b32.xlu0 %v525, 32
    %v528 = vpop.permute.xlu0 %527
    %v530 = vmul.f32 %v512, %v528
    %v531 = vadd.f32 %v116, %v471
    %v532 = vxor.u32 %v531, 2147483648
    %v533 = vmul.f32 %v532, 1.442695
    %v534 = vpow.pop %v533
    %v535 = vadd.f32 %v534, 1.0
    %v536 = vrcp.pop %v535
    %v537 = vmul.f32 %v535, %v536
    %v538 = vsub.f32 1.0, %v537
    %v539 = vmul.f32 %v536, %v538
    %v540 = vadd.f32 %v536, %v539
    %vm541 = vweird.f32 %v535
    %vm542 = vweird.f32 %v536
    %vm543 = vmor %vm541, %vm542
    %v544 = vsel %vm543, %v536, %v540
    %v545 = vand.u32 2147483647, %v535
    %vm546 = vcmp.eq.f32.partialorder %v545, 8.507059e+37
    %v547 = vand.u32 %v535, 2147483648
    %v548 = vor.u32 1.1754944e-38, %v547
    %v549 = vsel %vm546, %v548, %v544
    %v550 = vmul.f32 1.0, %v549
    %v551 = vtanh.pop %v531
    %v552 = vmul.f32 %v550, %v434
    %554 = vrot.lane.b32.xlu0 %v551, 32
    %v555 = vpop.permute.xlu0 %554
    %v557 = vmul.f32 %v550, %v555
    %559 = vrot.lane.b32.xlu0 %v557, 32
    %v560 = vpop.permute.xlu0 %559
    %v562 = vadd.f32 %v552, %v560
    %v563 = vtanh.pop %v562
    %565 = vrot.lane.b32.xlu0 %v563, 32
    %v566 = vpop.permute.xlu0 %565
    %v568 = vmul.f32 %v550, %v566
    %570 = vrot.lane.b32.xlu0 %v568, 64
    %v571 = vpop.permute.xlu0 %570
    %574 = vrot.lane.b32.xlu0 %v530, 96
    %v575 = vpop.permute.xlu0 %574
    %v577 = vsel %vm191, %v571, %v575
    %v579 = vsel %vm193, %v577, 0
    %581 = vmatpush.msra.mxu0 0.0
    %582 = vmatpush.msra.mxu0 0.0
    %583 = vmatpush.msra.mxu0 0.0
    %584 = vmatpush.msra.mxu0 0.0
    %585 = vmatpush.msra.mxu0 0.0
    %586 = vmatpush.msra.mxu0 0.0
    %587 = vmatpush.msra.mxu0 0.0
    %588 = vmatpush.msra.mxu0 0.0
    %589 = vmatpush.msra.mxu0 %v144
    %590 = vmatpush.msra.mxu0 %v142
    %591 = vmatpush.msra.mxu0 %v140
    %592 = vmatpush.msra.mxu0 %v138
    %593 = vmatpush.msra.mxu0 %v136
    %594 = vmatpush.msra.mxu0 %v134
    %595 = vmatpush.msra.mxu0 %v132
    %596 = vmatpush.msra.mxu0 %v130
    %597 = vmatmul.f32.gmra.mxu0 %v579
    %v598 = vpop.f32.mrf.mxu0
    %v599 = vadd.f32 0.0, %v598
    %600 = vdwg.mxu0
    %601 = vmatpush.msra.mxu0 0.0
    %602 = vmatpush.msra.mxu0 0.0
    %603 = vmatpush.msra.mxu0 0.0
    %604 = vmatpush.msra.mxu0 0.0
    %605 = vmatpush.msra.mxu0 0.0
    %606 = vmatpush.msra.mxu0 0.0
    %607 = vmatpush.msra.mxu0 0.0
    %608 = vmatpush.msra.mxu0 0.0
    %609 = vmatpush.msra.mxu0 %v145
    %610 = vmatpush.msra.mxu0 %v143
    %611 = vmatpush.msra.mxu0 %v141
    %612 = vmatpush.msra.mxu0 %v139
    %613 = vmatpush.msra.mxu0 %v137
    %614 = vmatpush.msra.mxu0 %v135
    %615 = vmatpush.msra.mxu0 %v133
    %616 = vmatpush.msra.mxu0 %v131
    %617 = vmatmul.f32.gmra.mxu0 %v579
    %v618 = vpop.f32.mrf.mxu0
    %v619 = vadd.f32 0.0, %v618
    %620 = vdwg.mxu0
    %v621 = vadd.f32 %v619, %v148
    %v622 = vxor.u32 %v621, 2147483648
    %v623 = vmul.f32 %v622, 1.442695
    %v624 = vpow.pop %v623
    %v625 = vadd.f32 %v624, 1.0
    %v626 = vrcp.pop %v625
    %v627 = vmul.f32 %v625, %v626
    %v628 = vsub.f32 1.0, %v627
    %v629 = vmul.f32 %v626, %v628
    %v630 = vadd.f32 %v626, %v629
    %vm631 = vweird.f32 %v625
    %vm632 = vweird.f32 %v626
    %vm633 = vmor %vm631, %vm632
    %v634 = vsel %vm633, %v626, %v630
    %v635 = vand.u32 2147483647, %v625
    %vm636 = vcmp.eq.f32.partialorder %v635, 8.507059e+37
    %v637 = vand.u32 %v625, 2147483648
    %v638 = vor.u32 1.1754944e-38, %v637
    %v639 = vsel %vm636, %v638, %v634
    %v640 = vmul.f32 1.0, %v639
    %v641 = vtanh.pop %v621
    %v642 = vmul.f32 %v640, %v524
    %644 = vrot.lane.b32.xlu0 %v641, 32
    %v645 = vpop.permute.xlu0 %644
    %v647 = vmul.f32 %v640, %v645
    %649 = vrot.lane.b32.xlu0 %v647, 32
    %v650 = vpop.permute.xlu0 %649
    %v652 = vadd.f32 %v642, %v650
    %v653 = vtanh.pop %v652
    %655 = vrot.lane.b32.xlu0 %v653, 32
    %v656 = vpop.permute.xlu0 %655
    %v658 = vmul.f32 %v640, %v656
    %v659 = vadd.f32 %v119, %v599
    %v660 = vxor.u32 %v659, 2147483648
    %v661 = vmul.f32 %v660, 1.442695
    %v662 = vpow.pop %v661
    %v663 = vadd.f32 %v662, 1.0
    %v664 = vrcp.pop %v663
    %v665 = vmul.f32 %v663, %v664
    %v666 = vsub.f32 1.0, %v665
    %v667 = vmul.f32 %v664, %v666
    %v668 = vadd.f32 %v664, %v667
    %vm669 = vweird.f32 %v663
    %vm670 = vweird.f32 %v664
    %vm671 = vmor %vm669, %vm670
    %v672 = vsel %vm671, %v664, %v668
    %v673 = vand.u32 2147483647, %v663
    %vm674 = vcmp.eq.f32.partialorder %v673, 8.507059e+37
    %v675 = vand.u32 %v663, 2147483648
    %v676 = vor.u32 1.1754944e-38, %v675
    %v677 = vsel %vm674, %v676, %v672
    %v678 = vmul.f32 1.0, %v677
    %v679 = vtanh.pop %v659
    %v680 = vmul.f32 %v678, %v562
    %682 = vrot.lane.b32.xlu0 %v679, 32
    %v683 = vpop.permute.xlu0 %682
    %v685 = vmul.f32 %v678, %v683
    %687 = vrot.lane.b32.xlu0 %v685, 32
    %v688 = vpop.permute.xlu0 %687
    %v690 = vadd.f32 %v680, %v688
    %v691 = vtanh.pop %v690
    %693 = vrot.lane.b32.xlu0 %v691, 32
    %v694 = vpop.permute.xlu0 %693
    %v696 = vmul.f32 %v678, %v694
    %698 = vrot.lane.b32.xlu0 %v696, 64
    %v699 = vpop.permute.xlu0 %698
    %702 = vrot.lane.b32.xlu0 %v658, 96
    %v703 = vpop.permute.xlu0 %702
    %v705 = vsel %vm191, %v699, %v703
    %v707 = vsel %vm193, %v705, 0
    %709 = vmatpush.msra.mxu0 0.0
    %710 = vmatpush.msra.mxu0 0.0
    %711 = vmatpush.msra.mxu0 0.0
    %712 = vmatpush.msra.mxu0 0.0
    %713 = vmatpush.msra.mxu0 0.0
    %714 = vmatpush.msra.mxu0 0.0
    %715 = vmatpush.msra.mxu0 0.0
    %716 = vmatpush.msra.mxu0 0.0
    %717 = vmatpush.msra.mxu0 %v144
    %718 = vmatpush.msra.mxu0 %v142
    %719 = vmatpush.msra.mxu0 %v140
    %720 = vmatpush.msra.mxu0 %v138
    %721 = vmatpush.msra.mxu0 %v136
    %722 = vmatpush.msra.mxu0 %v134
    %723 = vmatpush.msra.mxu0 %v132
    %724 = vmatpush.msra.mxu0 %v130
    %725 = vmatmul.f32.gmra.mxu0 %v707
    %v726 = vpop.f32.mrf.mxu0
    %v727 = vadd.f32 0.0, %v726
    %728 = vdwg.mxu0
    %729 = vmatpush.msra.mxu0 0.0
    %730 = vmatpush.msra.mxu0 0.0
    %731 = vmatpush.msra.mxu0 0.0
    %732 = vmatpush.msra.mxu0 0.0
    %733 = vmatpush.msra.mxu0 0.0
    %734 = vmatpush.msra.mxu0 0.0
    %735 = vmatpush.msra.mxu0 0.0
    %736 = vmatpush.msra.mxu0 0.0
    %737 = vmatpush.msra.mxu0 %v145
    %738 = vmatpush.msra.mxu0 %v143
    %739 = vmatpush.msra.mxu0 %v141
    %740 = vmatpush.msra.mxu0 %v139
    %741 = vmatpush.msra.mxu0 %v137
    %742 = vmatpush.msra.mxu0 %v135
    %743 = vmatpush.msra.mxu0 %v133
    %744 = vmatpush.msra.mxu0 %v131
    %745 = vmatmul.f32.gmra.mxu0 %v707
    %v746 = vpop.f32.mrf.mxu0
    %v747 = vadd.f32 0.0, %v746
    %748 = vdwg.mxu0
    %v749 = vadd.f32 %v747, %v148
    %v750 = vxor.u32 %v749, 2147483648
    %v751 = vmul.f32 %v750, 1.442695
    %v752 = vpow.pop %v751
    %v753 = vadd.f32 %v752, 1.0
    %v754 = vrcp.pop %v753
    %v755 = vmul.f32 %v753, %v754
    %v756 = vsub.f32 1.0, %v755
    %v757 = vmul.f32 %v754, %v756
    %v758 = vadd.f32 %v754, %v757
    %vm759 = vweird.f32 %v753
    %vm760 = vweird.f32 %v754
    %vm761 = vmor %vm759, %vm760
    %v762 = vsel %vm761, %v754, %v758
    %v763 = vand.u32 2147483647, %v753
    %vm764 = vcmp.eq.f32.partialorder %v763, 8.507059e+37
    %v765 = vand.u32 %v753, 2147483648
    %v766 = vor.u32 1.1754944e-38, %v765
    %v767 = vsel %vm764, %v766, %v762
    %v768 = vmul.f32 1.0, %v767
    %v769 = vtanh.pop %v749
    %v770 = vmul.f32 %v768, %v652
    %772 = vrot.lane.b32.xlu0 %v769, 32
    %v773 = vpop.permute.xlu0 %772
    %v775 = vmul.f32 %v768, %v773
    %777 = vrot.lane.b32.xlu0 %v775, 32
    %v778 = vpop.permute.xlu0 %777
    %v780 = vadd.f32 %v770, %v778
    %v781 = vtanh.pop %v780
    %783 = vrot.lane.b32.xlu0 %v781, 32
    %v784 = vpop.permute.xlu0 %783
    %v786 = vmul.f32 %v768, %v784
    %v787 = vadd.f32 %v122, %v727
    %v788 = vxor.u32 %v787, 2147483648
    %v789 = vmul.f32 %v788, 1.442695
    %v790 = vpow.pop %v789
    %v791 = vadd.f32 %v790, 1.0
    %v792 = vrcp.pop %v791
    %v793 = vmul.f32 %v791, %v792
    %v794 = vsub.f32 1.0, %v793
    %v795 = vmul.f32 %v792, %v794
    %v796 = vadd.f32 %v792, %v795
    %vm797 = vweird.f32 %v791
    %vm798 = vweird.f32 %v792
    %vm799 = vmor %vm797, %vm798
    %v800 = vsel %vm799, %v792, %v796
    %v801 = vand.u32 2147483647, %v791
    %vm802 = vcmp.eq.f32.partialorder %v801, 8.507059e+37
    %v803 = vand.u32 %v791, 2147483648
    %v804 = vor.u32 1.1754944e-38, %v803
    %v805 = vsel %vm802, %v804, %v800
    %v806 = vmul.f32 1.0, %v805
    %v807 = vtanh.pop %v787
    %v808 = vmul.f32 %v806, %v690
    %810 = vrot.lane.b32.xlu0 %v807, 32
    %v811 = vpop.permute.xlu0 %810
    %v813 = vmul.f32 %v806, %v811
    %815 = vrot.lane.b32.xlu0 %v813, 32
    %v816 = vpop.permute.xlu0 %815
    %v818 = vadd.f32 %v808, %v816
    %v819 = vtanh.pop %v818
    %821 = vrot.lane.b32.xlu0 %v819, 32
    %v822 = vpop.permute.xlu0 %821
    %v824 = vmul.f32 %v806, %v822
    %826 = vrot.lane.b32.xlu0 %v824, 64
    %v827 = vpop.permute.xlu0 %826
    %830 = vrot.lane.b32.xlu0 %v786, 96
    %v831 = vpop.permute.xlu0 %830
    %v833 = vsel %vm191, %v827, %v831
    %v835 = vsel %vm193, %v833, 0
    %837 = vmatpush.msra.mxu0 0.0
    %838 = vmatpush.msra.mxu0 0.0
    %839 = vmatpush.msra.mxu0 0.0
    %840 = vmatpush.msra.mxu0 0.0
    %841 = vmatpush.msra.mxu0 0.0
    %842 = vmatpush.msra.mxu0 0.0
    %843 = vmatpush.msra.mxu0 0.0
    %844 = vmatpush.msra.mxu0 0.0
    %845 = vmatpush.msra.mxu0 %v144
    %846 = vmatpush.msra.mxu0 %v142
    %847 = vmatpush.msra.mxu0 %v140
    %848 = vmatpush.msra.mxu0 %v138
    %849 = vmatpush.msra.mxu0 %v136
    %850 = vmatpush.msra.mxu0 %v134
    %851 = vmatpush.msra.mxu0 %v132
    %852 = vmatpush.msra.mxu0 %v130
    %853 = vmatmul.f32.gmra.mxu0 %v835
    %v854 = vpop.f32.mrf.mxu0
    %v855 = vadd.f32 0.0, %v854
    %856 = vdwg.mxu0
    %857 = vmatpush.msra.mxu0 0.0
    %858 = vmatpush.msra.mxu0 0.0
    %859 = vmatpush.msra.mxu0 0.0
    %860 = vmatpush.msra.mxu0 0.0
    %861 = vmatpush.msra.mxu0 0.0
    %862 = vmatpush.msra.mxu0 0.0
    %863 = vmatpush.msra.mxu0 0.0
    %864 = vmatpush.msra.mxu0 0.0
    %865 = vmatpush.msra.mxu0 %v145
    %866 = vmatpush.msra.mxu0 %v143
    %867 = vmatpush.msra.mxu0 %v141
    %868 = vmatpush.msra.mxu0 %v139
    %869 = vmatpush.msra.mxu0 %v137
    %870 = vmatpush.msra.mxu0 %v135
    %871 = vmatpush.msra.mxu0 %v133
    %872 = vmatpush.msra.mxu0 %v131
    %873 = vmatmul.f32.gmra.mxu0 %v835
    %v874 = vpop.f32.mrf.mxu0
    %v875 = vadd.f32 0.0, %v874
    %876 = vdwg.mxu0
    %v877 = vadd.f32 %v875, %v148
    %v878 = vxor.u32 %v877, 2147483648
    %v879 = vmul.f32 %v878, 1.442695
    %v880 = vpow.pop %v879
    %v881 = vadd.f32 %v880, 1.0
    %v882 = vrcp.pop %v881
    %v883 = vmul.f32 %v881, %v882
    %v884 = vsub.f32 1.0, %v883
    %v885 = vmul.f32 %v882, %v884
    %v886 = vadd.f32 %v882, %v885
    %vm887 = vweird.f32 %v881
    %vm888 = vweird.f32 %v882
    %vm889 = vmor %vm887, %vm888
    %v890 = vsel %vm889, %v882, %v886
    %v891 = vand.u32 2147483647, %v881
    %vm892 = vcmp.eq.f32.partialorder %v891, 8.507059e+37
    %v893 = vand.u32 %v881, 2147483648
    %v894 = vor.u32 1.1754944e-38, %v893
    %v895 = vsel %vm892, %v894, %v890
    %v896 = vmul.f32 1.0, %v895
    %v897 = vtanh.pop %v877
    %v898 = vmul.f32 %v896, %v780
    %900 = vrot.lane.b32.xlu0 %v897, 32
    %v901 = vpop.permute.xlu0 %900
    %v903 = vmul.f32 %v896, %v901
    %905 = vrot.lane.b32.xlu0 %v903, 32
    %v906 = vpop.permute.xlu0 %905
    %v908 = vadd.f32 %v898, %v906
    %v909 = vtanh.pop %v908
    %911 = vrot.lane.b32.xlu0 %v909, 32
    %v912 = vpop.permute.xlu0 %911
    %v914 = vmul.f32 %v896, %v912
    %v915 = vadd.f32 %v125, %v855
    %v916 = vxor.u32 %v915, 2147483648
    %v917 = vmul.f32 %v916, 1.442695
    %v918 = vpow.pop %v917
    %v919 = vadd.f32 %v918, 1.0
    %v920 = vrcp.pop %v919
    %v921 = vmul.f32 %v919, %v920
    %v922 = vsub.f32 1.0, %v921
    %v923 = vmul.f32 %v920, %v922
    %v924 = vadd.f32 %v920, %v923
    %vm925 = vweird.f32 %v919
    %vm926 = vweird.f32 %v920
    %vm927 = vmor %vm925, %vm926
    %v928 = vsel %vm927, %v920, %v924
    %v929 = vand.u32 2147483647, %v919
    %vm930 = vcmp.eq.f32.partialorder %v929, 8.507059e+37
    %v931 = vand.u32 %v919, 2147483648
    %v932 = vor.u32 1.1754944e-38, %v931
    %v933 = vsel %vm930, %v932, %v928
    %v934 = vmul.f32 1.0, %v933
    %v935 = vtanh.pop %v915
    %v936 = vmul.f32 %v934, %v818
    %938 = vrot.lane.b32.xlu0 %v935, 32
    %v939 = vpop.permute.xlu0 %938
    %v941 = vmul.f32 %v934, %v939
    %943 = vrot.lane.b32.xlu0 %v941, 32
    %v944 = vpop.permute.xlu0 %943
    %v946 = vadd.f32 %v936, %v944
    %v947 = vtanh.pop %v946
    %949 = vrot.lane.b32.xlu0 %v947, 32
    %v950 = vpop.permute.xlu0 %949
    %v952 = vmul.f32 %v934, %v950
    %954 = vrot.lane.b32.xlu0 %v952, 64
    %v955 = vpop.permute.xlu0 %954
    %958 = vrot.lane.b32.xlu0 %v914, 96
    %v959 = vpop.permute.xlu0 %958
    %v961 = vsel %vm191, %v955, %v959
    %v963 = vsel %vm193, %v961, 0
    %965 = vmatpush.msra.mxu0 0.0
    %966 = vmatpush.msra.mxu0 0.0
    %967 = vmatpush.msra.mxu0 0.0
    %968 = vmatpush.msra.mxu0 0.0
    %969 = vmatpush.msra.mxu0 0.0
    %970 = vmatpush.msra.mxu0 0.0
    %971 = vmatpush.msra.mxu0 0.0
    %972 = vmatpush.msra.mxu0 0.0
    %973 = vmatpush.msra.mxu0 %v144
    %974 = vmatpush.msra.mxu0 %v142
    %975 = vmatpush.msra.mxu0 %v140
    %976 = vmatpush.msra.mxu0 %v138
    %977 = vmatpush.msra.mxu0 %v136
    %978 = vmatpush.msra.mxu0 %v134
    %979 = vmatpush.msra.mxu0 %v132
    %980 = vmatpush.msra.mxu0 %v130
    %981 = vmatmul.f32.gmra.mxu0 %v963
    %v982 = vpop.f32.mrf.mxu0
    %v983 = vadd.f32 0.0, %v982
    %984 = vdwg.mxu0
    %985 = vmatpush.msra.mxu0 0.0
    %986 = vmatpush.msra.mxu0 0.0
    %987 = vmatpush.msra.mxu0 0.0
    %988 = vmatpush.msra.mxu0 0.0
    %989 = vmatpush.msra.mxu0 0.0
    %990 = vmatpush.msra.mxu0 0.0
    %991 = vmatpush.msra.mxu0 0.0
    %992 = vmatpush.msra.mxu0 0.0
    %993 = vmatpush.msra.mxu0 %v145
    %994 = vmatpush.msra.mxu0 %v143
    %995 = vmatpush.msra.mxu0 %v141
    %996 = vmatpush.msra.mxu0 %v139
    %997 = vmatpush.msra.mxu0 %v137
    %998 = vmatpush.msra.mxu0 %v135
    %999 = vmatpush.msra.mxu0 %v133
    %1000 = vmatpush.msra.mxu0 %v131
    %1001 = vmatmul.f32.gmra.mxu0 %v963
    %v1002 = vpop.f32.mrf.mxu0
    %v1003 = vadd.f32 0.0, %v1002
    %1004 = vdwg.mxu0
    %v1005 = vadd.f32 %v1003, %v148
    %v1006 = vxor.u32 %v1005, 2147483648
    %v1007 = vmul.f32 %v1006, 1.442695
    %v1008 = vpow.pop %v1007
    %v1009 = vadd.f32 %v1008, 1.0
    %v1010 = vrcp.pop %v1009
    %v1011 = vmul.f32 %v1009, %v1010
    %v1012 = vsub.f32 1.0, %v1011
    %v1013 = vmul.f32 %v1010, %v1012
    %v1014 = vadd.f32 %v1010, %v1013
    %vm1015 = vweird.f32 %v1009
    %vm1016 = vweird.f32 %v1010
    %vm1017 = vmor %vm1015, %vm1016
    %v1018 = vsel %vm1017, %v1010, %v1014
    %v1019 = vand.u32 2147483647, %v1009
    %vm1020 = vcmp.eq.f32.partialorder %v1019, 8.507059e+37
    %v1021 = vand.u32 %v1009, 2147483648
    %v1022 = vor.u32 1.1754944e-38, %v1021
    %v1023 = vsel %vm1020, %v1022, %v1018
    %v1024 = vmul.f32 1.0, %v1023
    %v1025 = vtanh.pop %v1005
    %v1026 = vmul.f32 %v1024, %v908
    %1028 = vrot.lane.b32.xlu0 %v1025, 32
    %v1029 = vpop.permute.xlu0 %1028
    %v1031 = vmul.f32 %v1024, %v1029
    %1033 = vrot.lane.b32.xlu0 %v1031, 32
    %v1034 = vpop.permute.xlu0 %1033
    %v1036 = vadd.f32 %v1026, %v1034
    %v1037 = vtanh.pop %v1036
    %1039 = vrot.lane.b32.xlu0 %v1037, 32
    %v1040 = vpop.permute.xlu0 %1039
    %v1042 = vmul.f32 %v1024, %v1040
    %v1043 = vadd.f32 %v128, %v983
    %v1044 = vxor.u32 %v1043, 2147483648
    %v1045 = vmul.f32 %v1044, 1.442695
    %v1046 = vpow.pop %v1045
    %v1047 = vadd.f32 %v1046, 1.0
    %v1048 = vrcp.pop %v1047
    %v1049 = vmul.f32 %v1047, %v1048
    %v1050 = vsub.f32 1.0, %v1049
    %v1051 = vmul.f32 %v1048, %v1050
    %v1052 = vadd.f32 %v1048, %v1051
    %vm1053 = vweird.f32 %v1047
    %vm1054 = vweird.f32 %v1048
    %vm1055 = vmor %vm1053, %vm1054
    %v1056 = vsel %vm1055, %v1048, %v1052
    %v1057 = vand.u32 2147483647, %v1047
    %vm1058 = vcmp.eq.f32.partialorder %v1057, 8.507059e+37
    %v1059 = vand.u32 %v1047, 2147483648
    %v1060 = vor.u32 1.1754944e-38, %v1059
    %v1061 = vsel %vm1058, %v1060, %v1056
    %v1062 = vmul.f32 1.0, %v1061
    %v1063 = vtanh.pop %v1043
    %v1064 = vmul.f32 %v1062, %v946
    %1066 = vrot.lane.b32.xlu0 %v1063, 32
    %v1067 = vpop.permute.xlu0 %1066
    %v1069 = vmul.f32 %v1062, %v1067
    %1071 = vrot.lane.b32.xlu0 %v1069, 32
    %v1072 = vpop.permute.xlu0 %1071
    %v1074 = vadd.f32 %v1064, %v1072
    %v1075 = vtanh.pop %v1074
    %1077 = vrot.lane.b32.xlu0 %v1075, 32
    %v1078 = vpop.permute.xlu0 %1077
    %v1080 = vmul.f32 %v1062, %v1078
    %1082 = vrot.lane.b32.xlu0 %v1080, 64
    %v1083 = vpop.permute.xlu0 %1082
    %1086 = vrot.lane.b32.xlu0 %v1042, 96
    %v1087 = vpop.permute.xlu0 %1086
    %v1089 = vsel %vm191, %v1083, %v1087
    %v1091 = vsel %vm193, %v1089, 0
    %1093 = vmatpush.msra.mxu0 0.0
    %1094 = vmatpush.msra.mxu0 0.0
    %1095 = vmatpush.msra.mxu0 0.0
    %1096 = vmatpush.msra.mxu0 0.0
    %1097 = vmatpush.msra.mxu0 0.0
    %1098 = vmatpush.msra.mxu0 0.0
    %1099 = vmatpush.msra.mxu0 0.0
    %1100 = vmatpush.msra.mxu0 0.0
    %1101 = vmatpush.msra.mxu0 %v145
    %1102 = vmatpush.msra.mxu0 %v143
    %1103 = vmatpush.msra.mxu0 %v141
    %1104 = vmatpush.msra.mxu0 %v139
    %1105 = vmatpush.msra.mxu0 %v137
    %1106 = vmatpush.msra.mxu0 %v135
    %1107 = vmatpush.msra.mxu0 %v133
    %1108 = vmatpush.msra.mxu0 %v131
    %1109 = vmatmul.f32.gmra.mxu0 %v1091
    %v1110 = vpop.f32.mrf.mxu0
    %v1111 = vadd.f32 0.0, %v1110
    %1112 = vdwg.mxu0
    %v1113 = vadd.f32 %v1111, %v148
    %v1114 = vxor.u32 %v1113, 2147483648
    %v1115 = vmul.f32 %v1114, 1.442695
    %v1116 = vpow.pop %v1115
    %v1117 = vadd.f32 %v1116, 1.0
    %v1118 = vrcp.pop %v1117
    %v1119 = vmul.f32 %v1117, %v1118
    %v1120 = vsub.f32 1.0, %v1119
    %v1121 = vmul.f32 %v1118, %v1120
    %v1122 = vadd.f32 %v1118, %v1121
    %vm1123 = vweird.f32 %v1117
    %vm1124 = vweird.f32 %v1118
    %vm1125 = vmor %vm1123, %vm1124
    %v1126 = vsel %vm1125, %v1118, %v1122
    %v1127 = vand.u32 2147483647, %v1117
    %vm1128 = vcmp.eq.f32.partialorder %v1127, 8.507059e+37
    %v1129 = vand.u32 %v1117, 2147483648
    %v1130 = vor.u32 1.1754944e-38, %v1129
    %v1131 = vsel %vm1128, %v1130, %v1126
    %v1132 = vmul.f32 1.0, %v1131
    %v1133 = vtanh.pop %v1113
    %v1134 = vmul.f32 %v1132, %v1036
    %1136 = vrot.lane.b32.xlu0 %v1133, 32
    %v1137 = vpop.permute.xlu0 %1136
    %v1139 = vmul.f32 %v1132, %v1137
    %1141 = vrot.lane.b32.xlu0 %v1139, 32
    %v1142 = vpop.permute.xlu0 %1141
    %v1144 = vadd.f32 %v1134, %v1142
    %v1145 = vtanh.pop %v1144
    %1147 = vrot.lane.b32.xlu0 %v1145, 32
    %v1148 = vpop.permute.xlu0 %1147
    %v1150 = vmul.f32 %v1132, %v1148
    %v1151 = vld [vmem:[%s5] sm:$0xff]
    %v1152 = vld [vmem:[%s5 + $0x8] sm:$0xff]
    %v1153 = vld [vmem:[%s5 + $0x10] sm:$0xff]
    %v1154 = vld [vmem:[%s5 + $0x18] sm:$0xff]
    %v1155 = vld [vmem:[%s6] sm:$0x1]
    %v1157 = vperm.slane %v1155, 0
    %1160 = vrot.lane.b32.xlu0 %v1150, 64
    %v1161 = vpop.permute.xlu0 %1160
    %v1162 = vsel %vm191, %v1161, 0
    %1164 = vmatpush.msra.mxu0 0.0
    %1165 = vmatpush.msra.mxu0 0.0
    %1166 = vmatpush.msra.mxu0 0.0
    %1167 = vmatpush.msra.mxu0 0.0
    %1168 = vmatpush.msra.mxu0 0.0
    %1169 = vmatpush.msra.mxu0 0.0
    %1170 = vmatpush.msra.mxu0 0.0
    %1171 = vmatpush.msra.mxu0 0.0
    %1172 = vmatpush.msra.mxu0 0.0
    %1173 = vmatpush.msra.mxu0 0.0
    %1174 = vmatpush.msra.mxu0 0.0
    %1175 = vmatpush.msra.mxu0 0.0
    %1176 = vmatpush.msra.mxu0 %v1154
    %1177 = vmatpush.msra.mxu0 %v1153
    %1178 = vmatpush.msra.mxu0 %v1152
    %1179 = vmatpush.msra.mxu0 %v1151
    %1180 = vmatmul.f32.gmra.mxu0 %v1162
    %v1181 = vpop.f32.mrf.mxu0
    %v1182 = vadd.f32 %v1157, %v1181
    %1183 = vdwg.mxu0
    %v1184 = vmax.f32 %v1182, 0.0
    %v1185 = vld [vmem:[%s7] sm:$0x1]
    %v1187 = vperm.slane %v1185, 0
    %v1189 = vmul.f32 %v1184, %v1187
    %v1190 = vsel %vm193, %v1189, 0.0
    %1191 = vadd.xlane.f32.xlu0 %v1190
    %v1192 = vpop.xlane.xlu0 %1191
    %v1193 = vld [vmem:[#allocation2] sm:$0x1]
    %v1195 = vperm.slane %v1193, 0
    %v1197 = vadd.f32 %v1192, %v1195
    %vm1198 = vcmask 7168
    %1199 = vst.msk [vmem:[%s9] sm:$0xff] %vm1198, %v1197
    // Predicated region
    $region42: #{tpu_custom_call.1} parent=1 // pred_check
      _
    $region43: #{tpu_custom_call.1} parent=1 // pred_check_branch
      %1201 = sbr.rel (0) target = $region45
    $region44: #{tpu_custom_call.1} parent=1 // pred_region
      _
    $region45: #{tpu_custom_call.1} parent=1 // pred_fallthru
      _
    // Predicated region
    $region46: #{tpu_custom_call.1} parent=1 // pred_check
      _
    $region47: #{tpu_custom_call.1} parent=1 // pred_check_branch
      %1203 = sbr.rel (0) target = $region49
    $region48: #{tpu_custom_call.1} parent=1 // pred_region
      _
    $region49: #{tpu_custom_call.1} parent=1 // pred_fallthru
      _
    %1204 = vsyncpa [#allocation4], 1

</llo_original>
